<compile_context>
chip_gen: v5e
topology: v5e:2x2
jax: 0.10.0
libtpu: 0.0.40
codegen_flags: <defaults>
</compile_context>

<pallas_src>
import functools

import jax
import jax.numpy as jnp
from jax import lax
from jax.experimental import pallas as pl
from jax.experimental.pallas import tpu as pltpu

# ---------------- small synthetic config ----------------
VOCAB = 128
HIDDEN = 256
NUM_HEADS = 2
HEAD_DIM = HIDDEN // NUM_HEADS          # 128
INTERMEDIATE_CFG = 512                  # config.intermediate_size
MLP_INTER = INTERMEDIATE_CFG // 2       # QWenMLP receives intermediate_size // 2
NUM_LAYERS = 2
EPS = 1e-6
ROPE_THETA = 10000.0
SEQ = 8
SCALE = HEAD_DIM ** (-0.5)


# ---------------- fused whole-model kernel ----------------
def _qwen_fused_kernel(
    h_in_ref,        # [T, H]        f32   initial hidden (embedding output)
    cos_ref,         # [T, hd]       f32   concat(cos, cos)
    sin_ref,         # [T, hd]       f32   concat(-sin, sin)  (NeoX sign)
    mask_ref,        # [T, T]        f32   additive causal mask (0 / -1e30)
    lnf_ref,         # [1, H]        f32   final RMSNorm weight
    spack_ref,       # [1, 1, 5H]    f32   ln_1 | qkv_b | ln_2   (per-layer)
    wpack_ref,       # [1, H, WTOT]  bf16  qkv | c_proj | gate_up | mlp_c_proj
    o_ref,           # [T, H]        f32   output
    h_sc,            # VMEM [T, H]   f32   hidden carried across layers
    r_sc,            # VMEM [T, H]   f32   residual carried across layers
    *, num_heads, head_dim, mlp_inter, scale, eps,
):
    l = pl.program_id(0)
    T, H = h_sc.shape
    hd = head_dim
    I = mlp_inter
    half = hd // 2

    # packed-slab column offsets (all multiples of 128)
    QKV0, QKV1 = 0, 3 * H
    CP0, CP1 = 3 * H, 4 * H
    GU0, GU1 = 4 * H, 4 * H + 2 * I
    MC0, MC1 = 4 * H + 2 * I, 4 * H + 2 * I + H

    def rms(z, w):  # z f32 [T, H], w f32 [1, H]
        var = jnp.mean(z * z, axis=-1, keepdims=True)
        return z * lax.rsqrt(var + eps) * w

    # Layer 0: residual <- hidden_in (emulated as hidden_in + 0).
    @pl.when(l == 0)
    def _():
        h_sc[...] = h_in_ref[...].astype(jnp.float32)
        r_sc[...] = jnp.zeros_like(r_sc)

    ln1_w = spack_ref[0, :, 0:H]              # [1, H]
    qkv_b = spack_ref[0, :, H:4 * H]          # [1, 3H]
    ln2_w = spack_ref[0, :, 4 * H:5 * H]      # [1, H]

    # ---- ln_1 (fused residual add for layers > 0) ----
    z = h_sc[...] + r_sc[...]
    r_sc[...] = z
    x = rms(z, ln1_w)                                             # [T, H] f32

    # ---- attention: c_attn (bias) -> RoPE -> causal softmax -> c_proj ----
    qkv = jnp.dot(x.astype(jnp.bfloat16), wpack_ref[0, :, QKV0:QKV1],
                  preferred_element_type=jnp.float32) + qkv_b     # [T, 3H] f32

    cosf = cos_ref[...]                                           # [T, hd]
    sinf = sin_ref[...]                                           # [T, hd]
    mask = mask_ref[...]                                          # [T, T]

    def rope(xh):  # NeoX rotate_half via lane slices (sign folded into sinf)
        xr = jnp.concatenate([xh[:, half:], xh[:, :half]], axis=-1)
        return xh * cosf + xr * sinf

    # Per-head attention with c_proj folded in (no heads concatenate).
    attn_hidden = jnp.zeros((T, H), jnp.float32)
    for h in range(num_heads):                 # static loop, 128-aligned slices
        lo = h * hd
        qh = rope(qkv[:, lo:lo + hd])
        kh = rope(qkv[:, H + lo:H + lo + hd])
        vh = qkv[:, 2 * H + lo:2 * H + lo + hd]
        s = lax.dot_general(qh.astype(jnp.bfloat16), kh.astype(jnp.bfloat16),
                            (((1,), (1,)), ((), ())),
                            preferred_element_type=jnp.float32) * scale + mask
        m = jnp.max(s, axis=-1, keepdims=True)
        p = jnp.exp(s - m)
        p = p * pl.reciprocal(jnp.sum(p, axis=-1, keepdims=True), approx=True)
        head_out = jnp.dot(p.astype(jnp.bfloat16), vh.astype(jnp.bfloat16),
                           preferred_element_type=jnp.float32)    # [T, hd]
        attn_hidden = attn_hidden + jnp.dot(
            head_out.astype(jnp.bfloat16),
            wpack_ref[0, lo:lo + hd, CP0:CP1],                    # [hd, H]
            preferred_element_type=jnp.float32)                   # [T, H]

    # ---- ln_2 (fused add) + MLP (gate_up -> SiluAndMul -> c_proj) ----
    z2 = attn_hidden + r_sc[...]
    r_sc[...] = z2
    x2 = rms(z2, ln2_w)

    gate_up = jnp.dot(x2.astype(jnp.bfloat16), wpack_ref[0, :, GU0:GU1],
                      preferred_element_type=jnp.float32)         # [T, 2I]
    g = gate_up[:, :I]
    u = gate_up[:, I:]
    act = g * jax.nn.sigmoid(g) * u                               # SiluAndMul
    mlp_out = jnp.dot(act.astype(jnp.bfloat16), wpack_ref[0, :, MC0:MC1],
                      preferred_element_type=jnp.float32)         # [T, H]
    h_sc[...] = mlp_out

    # ---- final ln_f on the last layer ----
    @pl.when(l == pl.num_programs(0) - 1)
    def _():
        z3 = mlp_out + r_sc[...]
        o_ref[...] = rms(z3, lnf_ref[...]).astype(o_ref.dtype)


def qwen_forward(params, input_ids, positions):
    # VocabParallelEmbedding: plain-JAX gather (glue).
    hidden = jnp.take(params["wte"], input_ids, axis=0)           # [T, H] f32
    cos_full, sin_signed = _rope_tables(positions)                # [T, hd] each

    T, H = hidden.shape
    hd = HEAD_DIM
    L = NUM_LAYERS
    I = MLP_INTER
    WTOT = 3 * H + H + 2 * I + H

    # Additive causal mask, computed once (hoisted out of the layer loop).
    row = jnp.arange(T, dtype=jnp.int32)[:, None]
    col = jnp.arange(T, dtype=jnp.int32)[None, :]
    mask = jnp.where(col <= row, 0.0, -1e30).astype(jnp.float32)  # [T, T]

    kernel = functools.partial(
        _qwen_fused_kernel,
        num_heads=NUM_HEADS, head_dim=HEAD_DIM, mlp_inter=I,
        scale=SCALE, eps=EPS)

    def bcast2(shape):
        return pl.BlockSpec(shape, lambda l: (0, 0))

    def per_layer(shape):
        return pl.BlockSpec((1,) + shape, lambda l: (l, 0, 0))

    return pl.pallas_call(
        kernel,
        out_shape=jax.ShapeDtypeStruct((T, H), jnp.float32),
        grid_spec=pltpu.PrefetchScalarGridSpec(
            num_scalar_prefetch=0,
            grid=(L,),
            in_specs=[
                bcast2((T, H)),                 # hidden_in
                bcast2((T, hd)),                # cos_full
                bcast2((T, hd)),                # sin_signed
                bcast2((T, T)),                 # additive causal mask
                bcast2((1, H)),                 # ln_f
                per_layer((1, 5 * H)),          # small f32 slab  [L, 1, 5H]
                per_layer((H, WTOT)),           # bf16 weight slab [L, H, WTOT]
            ],
            out_specs=pl.BlockSpec((T, H), lambda l: (0, 0)),
            scratch_shapes=[
                pltpu.VMEM((T, H), jnp.float32),   # hidden carry
                pltpu.VMEM((T, H), jnp.float32),   # residual carry
            ],
        ),
        compiler_params=pltpu.CompilerParams(
            dimension_semantics=("arbitrary",)),
    )(hidden, cos_full, sin_signed, mask, params["ln_f"].reshape(1, H),
      params["s_pack"], params["w_pack"])


# ---------------- glue: params & RoPE tables ----------------
def _rope_tables(positions):
    inv_freq = 1.0 / (
        ROPE_THETA ** (jnp.arange(0, HEAD_DIM, 2, dtype=jnp.float32) / HEAD_DIM)
    )
    freqs = positions.astype(jnp.float32)[:, None] * inv_freq[None, :]  # [T, hd//2]
    cos = jnp.cos(freqs)
    sin = jnp.sin(freqs)
    cos_full = jnp.concatenate([cos, cos], axis=-1)        # [T, hd]
    sin_signed = jnp.concatenate([-sin, sin], axis=-1)     # [T, hd] (NeoX sign)
    return cos_full, sin_signed


def init_params(key):
    def nrm(k, shape, scale=0.02, dtype=jnp.float32):
        return (jax.random.normal(k, shape, dtype=jnp.float32) * scale).astype(dtype)

    keys = jax.random.split(key, 8)
    L, H, I = NUM_LAYERS, HIDDEN, MLP_INTER
    # Packing of the four matmul weights into one slab requires I == H
    # (true for this toy config: 512 // 2 == 256).
    assert I == H

    ln_1 = jnp.ones((L, 1, H), jnp.float32) + nrm(keys[1], (L, 1, H), 0.01)
    qkv_b = nrm(keys[3], (L, 1, 3 * H), 0.01)
    ln_2 = jnp.ones((L, 1, H), jnp.float32) + nrm(keys[5], (L, 1, H), 0.01)

    qkv_w = nrm(keys[2], (L, H, 3 * H), dtype=jnp.bfloat16)
    c_proj_w = nrm(keys[4], (L, H, H), dtype=jnp.bfloat16)
    gate_up_w = nrm(keys[6], (L, H, 2 * I), dtype=jnp.bfloat16)
    mlp_c_proj_w = nrm(keys[7], (L, I, H), dtype=jnp.bfloat16)

    return {
        "wte": nrm(keys[0], (VOCAB, H)),
        "ln_f": jnp.ones((H,), jnp.float32),
        # Packed per-layer slabs (built once at init, not per forward call).
        "s_pack": jnp.concatenate([ln_1, qkv_b, ln_2], axis=-1),          # [L,1,5H] f32
        "w_pack": jnp.concatenate([qkv_w, c_proj_w, gate_up_w,
                                   mlp_c_proj_w], axis=-1),               # [L,H,1792] bf16
    }


if __name__ == "__main__":
    key = jax.random.PRNGKey(0)
    pkey, ikey = jax.random.split(key)
    params = init_params(pkey)
    input_ids = jax.random.randint(ikey, (SEQ,), 0, VOCAB, dtype=jnp.int32)
    positions = jnp.arange(SEQ, dtype=jnp.int32)

    out = jax.jit(qwen_forward)(params, input_ids, positions)
    out = jax.block_until_ready(out)

    assert out.shape == (SEQ, HIDDEN), out.shape
    assert bool(jnp.all(jnp.isfinite(out)))
    print("KERNEL_OK")
</pallas_src>

<mosaic_0001>
module attributes {stable_mosaic.version = 11 : i64} {
  func.func @_qwen_fused_kernel(%arg0: i32, %arg1: memref<8x256xf32, #tpu.memory_space<vmem>>, %arg2: memref<8x128xf32, #tpu.memory_space<vmem>>, %arg3: memref<8x128xf32, #tpu.memory_space<vmem>>, %arg4: memref<8x8xf32, #tpu.memory_space<vmem>>, %arg5: memref<1x256xf32, #tpu.memory_space<vmem>>, %arg6: memref<1x1x1280xf32, #tpu.memory_space<vmem>>, %arg7: memref<1x256x1792xbf16, #tpu.memory_space<vmem>>, %arg8: memref<8x256xf32, #tpu.memory_space<vmem>>, %arg9: memref<8x256xf32, #tpu.memory_space<vmem>>, %arg10: memref<8x256xf32, #tpu.memory_space<vmem>>) attributes {dimension_semantics = [#tpu.dimension_semantics<arbitrary>], iteration_bounds = array<i64: 2>, scalar_prefetch = 0 : i64, scratch_operands = 2 : i64, tpu.core_type = #tpu.core_type<tc>, window_params = [{pipeline_mode = #tpu.pipeline_mode<synchronous>, transform_indices = @transform_0, window_bounds = array<i64: 8, 256>}, {pipeline_mode = #tpu.pipeline_mode<synchronous>, transform_indices = @transform_1, window_bounds = array<i64: 8, 128>}, {pipeline_mode = #tpu.pipeline_mode<synchronous>, transform_indices = @transform_2, window_bounds = array<i64: 8, 128>}, {pipeline_mode = #tpu.pipeline_mode<synchronous>, transform_indices = @transform_3, window_bounds = array<i64: 8, 8>}, {pipeline_mode = #tpu.pipeline_mode<synchronous>, transform_indices = @transform_4, window_bounds = array<i64: 1, 256>}, {transform_indices = @transform_5, window_bounds = array<i64: 1, 1, 1280>}, {transform_indices = @transform_6, window_bounds = array<i64: 1, 256, 1792>}, {pipeline_mode = #tpu.pipeline_mode<synchronous>, transform_indices = @transform_7, window_bounds = array<i64: 8, 256>}]} {
    %c0_i32 = arith.constant 0 : i32
    %0 = arith.cmpi eq, %arg0, %c0_i32 : i32
    %1 = arith.extui %0 : i1 to i32
    %c0_i32_0 = arith.constant 0 : i32
    %2 = arith.cmpi ne, %1, %c0_i32_0 : i32
    scf.if %2 {
      %c0_60 = arith.constant 0 : index
      %c0_61 = arith.constant 0 : index
      %149 = vector.load %arg1[%c0_60, %c0_61] : memref<8x256xf32, #tpu.memory_space<vmem>>, vector<8x256xf32>
      %c0_62 = arith.constant 0 : index
      %c0_63 = arith.constant 0 : index
      %150 = vector.load %arg9[%c0_62, %c0_63] : memref<8x256xf32, #tpu.memory_space<vmem>>, vector<8x256xf32>
      tpu.vector_store %arg9[%c0_62, %c0_63], %149 {strides = array<i32>} : memref<8x256xf32, #tpu.memory_space<vmem>>, vector<8x256xf32>,
      %cst_64 = arith.constant 0.000000e+00 : f32
      %151 = vector.broadcast %cst_64 : f32 to vector<8x256xf32>
      %c0_65 = arith.constant 0 : index
      %c0_66 = arith.constant 0 : index
      %152 = vector.load %arg10[%c0_65, %c0_66] : memref<8x256xf32, #tpu.memory_space<vmem>>, vector<8x256xf32>
      tpu.vector_store %arg10[%c0_65, %c0_66], %151 {strides = array<i32>} : memref<8x256xf32, #tpu.memory_space<vmem>>, vector<8x256xf32>,
    } else {
    }
    %c0 = arith.constant 0 : index
    %c0_1 = arith.constant 0 : index
    %c0_2 = arith.constant 0 : index
    %3 = vector.load %arg6[%c0, %c0_1, %c0_2] : memref<1x1x1280xf32, #tpu.memory_space<vmem>>, vector<1x1x256xf32>
    %4 = vector.shape_cast %3 : vector<1x1x256xf32> to vector<1x256xf32>
    %c0_3 = arith.constant 0 : index
    %c0_4 = arith.constant 0 : index
    %c256 = arith.constant 256 : index
    %5 = vector.load %arg6[%c0_3, %c0_4, %c256] : memref<1x1x1280xf32, #tpu.memory_space<vmem>>, vector<1x1x768xf32>
    %6 = vector.shape_cast %5 : vector<1x1x768xf32> to vector<1x768xf32>
    %c0_5 = arith.constant 0 : index
    %c0_6 = arith.constant 0 : index
    %c1024 = arith.constant 1024 : index
    %7 = vector.load %arg6[%c0_5, %c0_6, %c1024] : memref<1x1x1280xf32, #tpu.memory_space<vmem>>, vector<1x1x256xf32>
    %8 = vector.shape_cast %7 : vector<1x1x256xf32> to vector<1x256xf32>
    %c0_7 = arith.constant 0 : index
    %c0_8 = arith.constant 0 : index
    %9 = vector.load %arg9[%c0_7, %c0_8] : memref<8x256xf32, #tpu.memory_space<vmem>>, vector<8x256xf32>
    %c0_9 = arith.constant 0 : index
    %c0_10 = arith.constant 0 : index
    %10 = vector.load %arg10[%c0_9, %c0_10] : memref<8x256xf32, #tpu.memory_space<vmem>>, vector<8x256xf32>
    %11 = arith.addf %9, %10 : vector<8x256xf32>
    %c0_11 = arith.constant 0 : index
    %c0_12 = arith.constant 0 : index
    %12 = vector.load %arg10[%c0_11, %c0_12] : memref<8x256xf32, #tpu.memory_space<vmem>>, vector<8x256xf32>
    tpu.vector_store %arg10[%c0_11, %c0_12], %11 {strides = array<i32>} : memref<8x256xf32, #tpu.memory_space<vmem>>, vector<8x256xf32>,
    %13 = arith.mulf %11, %11 : vector<8x256xf32>
    %cst = arith.constant dense<0.000000e+00> : vector<8xf32>
    %14 = vector.multi_reduction <add>, %13, %cst [1] : vector<8x256xf32> to vector<8xf32>
    %15 = vector.shape_cast %14 : vector<8xf32> to vector<8x1xf32>
    %cst_13 = arith.constant 2.560000e+02 : f32
    %16 = vector.broadcast %cst_13 : f32 to vector<8x1xf32>
    %17 = arith.divf %15, %16 : vector<8x1xf32>
    %cst_14 = arith.constant 9.99999997E-7 : f32
    %18 = vector.broadcast %cst_14 : f32 to vector<8x1xf32>
    %19 = arith.addf %17, %18 : vector<8x1xf32>
    %20 = math.rsqrt %19 : vector<8x1xf32>
    %21 = vector.broadcast %20 : vector<8x1xf32> to vector<8x256xf32>
    %22 = arith.mulf %11, %21 : vector<8x256xf32>
    %23 = vector.broadcast %4 : vector<1x256xf32> to vector<8x256xf32>
    %24 = arith.mulf %22, %23 : vector<8x256xf32>
    %25 = arith.truncf %24 : vector<8x256xf32> to vector<8x256xbf16>
    %c0_15 = arith.constant 0 : index
    %c0_16 = arith.constant 0 : index
    %c0_17 = arith.constant 0 : index
    %26 = vector.load %arg7[%c0_15, %c0_16, %c0_17] : memref<1x256x1792xbf16, #tpu.memory_space<vmem>>, vector<1x256x768xbf16>
    %27 = vector.shape_cast %26 : vector<1x256x768xbf16> to vector<256x768xbf16>
    %cst_18 = arith.constant dense<0.000000e+00> : vector<8x768xf32>
    %28 = tpu.matmul %25, %27, %cst_18 {dimension_numbers = #tpu.dot_dimension_numbers<[1], [0], [0], [1], [0, 0, 1, 1], [], []>} : vector<8x256xbf16>, vector<256x768xbf16>, vector<8x768xf32> -> vector<8x768xf32>
    %29 = vector.broadcast %6 : vector<1x768xf32> to vector<8x768xf32>
    %30 = arith.addf %28, %29 : vector<8x768xf32>
    %c0_19 = arith.constant 0 : index
    %c0_20 = arith.constant 0 : index
    %31 = vector.load %arg2[%c0_19, %c0_20] : memref<8x128xf32, #tpu.memory_space<vmem>>, vector<8x128xf32>
    %c0_21 = arith.constant 0 : index
    %c0_22 = arith.constant 0 : index
    %32 = vector.load %arg3[%c0_21, %c0_22] : memref<8x128xf32, #tpu.memory_space<vmem>>, vector<8x128xf32>
    %c0_23 = arith.constant 0 : index
    %c0_24 = arith.constant 0 : index
    %33 = vector.load %arg4[%c0_23, %c0_24] : memref<8x8xf32, #tpu.memory_space<vmem>>, vector<8x8xf32>
    %cst_25 = arith.constant 0.000000e+00 : f32
    %34 = vector.broadcast %cst_25 : f32 to vector<8x256xf32>
    %35 = vector.extract_strided_slice %30 {offsets = [0, 0], sizes = [8, 128], strides = [1, 1]} : vector<8x768xf32> to vector<8x128xf32>
    %36 = vector.extract_strided_slice %35 {offsets = [0, 64], sizes = [8, 64], strides = [1, 1]} : vector<8x128xf32> to vector<8x64xf32>
    %37 = vector.extract_strided_slice %35 {offsets = [0, 0], sizes = [8, 64], strides = [1, 1]} : vector<8x128xf32> to vector<8x64xf32>
    %38 = tpu.concatenate %36, %37 in 1 : vector<8x64xf32>, vector<8x64xf32> -> vector<8x128xf32>
    %39 = arith.mulf %35, %31 : vector<8x128xf32>
    %40 = arith.mulf %38, %32 : vector<8x128xf32>
    %41 = arith.addf %39, %40 : vector<8x128xf32>
    %42 = vector.extract_strided_slice %30 {offsets = [0, 256], sizes = [8, 128], strides = [1, 1]} : vector<8x768xf32> to vector<8x128xf32>
    %43 = vector.extract_strided_slice %42 {offsets = [0, 64], sizes = [8, 64], strides = [1, 1]} : vector<8x128xf32> to vector<8x64xf32>
    %44 = vector.extract_strided_slice %42 {offsets = [0, 0], sizes = [8, 64], strides = [1, 1]} : vector<8x128xf32> to vector<8x64xf32>
    %45 = tpu.concatenate %43, %44 in 1 : vector<8x64xf32>, vector<8x64xf32> -> vector<8x128xf32>
    %46 = arith.mulf %42, %31 : vector<8x128xf32>
    %47 = arith.mulf %45, %32 : vector<8x128xf32>
    %48 = arith.addf %46, %47 : vector<8x128xf32>
    %49 = vector.extract_strided_slice %30 {offsets = [0, 512], sizes = [8, 128], strides = [1, 1]} : vector<8x768xf32> to vector<8x128xf32>
    %50 = arith.truncf %41 : vector<8x128xf32> to vector<8x128xbf16>
    %51 = arith.truncf %48 : vector<8x128xf32> to vector<8x128xbf16>
    %cst_26 = arith.constant dense<0.000000e+00> : vector<8x8xf32>
    %52 = tpu.matmul %50, %51, %cst_26 {dimension_numbers = #tpu.dot_dimension_numbers<[1], [1], [0], [0], [0, 0, 1, 0], [], []>} : vector<8x128xbf16>, vector<8x128xbf16>, vector<8x8xf32> -> vector<8x8xf32>
    %cst_27 = arith.constant 0.0883883461 : f32
    %53 = vector.broadcast %cst_27 : f32 to vector<8x8xf32>
    %54 = arith.mulf %52, %53 : vector<8x8xf32>
    %55 = arith.addf %54, %33 : vector<8x8xf32>
    %cst_28 = arith.constant dense<0xFF800000> : vector<8xf32>
    %56 = vector.multi_reduction <maximumf>, %55, %cst_28 [1] : vector<8x8xf32> to vector<8xf32>
    %57 = vector.shape_cast %56 : vector<8xf32> to vector<8x1xf32>
    %58 = vector.broadcast %57 : vector<8x1xf32> to vector<8x8xf32>
    %59 = arith.subf %55, %58 : vector<8x8xf32>
    %60 = math.exp %59 : vector<8x8xf32>
    %cst_29 = arith.constant dense<0.000000e+00> : vector<8xf32>
    %61 = vector.multi_reduction <add>, %60, %cst_29 [1] : vector<8x8xf32> to vector<8xf32>
    %62 = vector.shape_cast %61 : vector<8xf32> to vector<8x1xf32>
    %63 = tpu.reciprocal %62 {approx = true} : vector<8x1xf32> -> vector<8x1xf32>
    %64 = vector.broadcast %63 : vector<8x1xf32> to vector<8x8xf32>
    %65 = arith.mulf %60, %64 : vector<8x8xf32>
    %66 = arith.truncf %65 : vector<8x8xf32> to vector<8x8xbf16>
    %67 = arith.truncf %49 : vector<8x128xf32> to vector<8x128xbf16>
    %cst_30 = arith.constant dense<0.000000e+00> : vector<8x128xf32>
    %68 = tpu.matmul %66, %67, %cst_30 {dimension_numbers = #tpu.dot_dimension_numbers<[1], [0], [0], [1], [0, 0, 1, 1], [], []>} : vector<8x8xbf16>, vector<8x128xbf16>, vector<8x128xf32> -> vector<8x128xf32>
    %69 = arith.truncf %68 : vector<8x128xf32> to vector<8x128xbf16>
    %c0_31 = arith.constant 0 : index
    %c0_32 = arith.constant 0 : index
    %c768 = arith.constant 768 : index
    %70 = vector.load %arg7[%c0_31, %c0_32, %c768] : memref<1x256x1792xbf16, #tpu.memory_space<vmem>>, vector<1x128x256xbf16>
    %71 = vector.shape_cast %70 : vector<1x128x256xbf16> to vector<128x256xbf16>
    %cst_33 = arith.constant dense<0.000000e+00> : vector<8x256xf32>
    %72 = tpu.matmul %69, %71, %cst_33 {dimension_numbers = #tpu.dot_dimension_numbers<[1], [0], [0], [1], [0, 0, 1, 1], [], []>} : vector<8x128xbf16>, vector<128x256xbf16>, vector<8x256xf32> -> vector<8x256xf32>
    %73 = arith.addf %34, %72 : vector<8x256xf32>
    %74 = vector.extract_strided_slice %30 {offsets = [0, 128], sizes = [8, 128], strides = [1, 1]} : vector<8x768xf32> to vector<8x128xf32>
    %75 = vector.extract_strided_slice %74 {offsets = [0, 64], sizes = [8, 64], strides = [1, 1]} : vector<8x128xf32> to vector<8x64xf32>
    %76 = vector.extract_strided_slice %74 {offsets = [0, 0], sizes = [8, 64], strides = [1, 1]} : vector<8x128xf32> to vector<8x64xf32>
    %77 = tpu.concatenate %75, %76 in 1 : vector<8x64xf32>, vector<8x64xf32> -> vector<8x128xf32>
    %78 = arith.mulf %74, %31 : vector<8x128xf32>
    %79 = arith.mulf %77, %32 : vector<8x128xf32>
    %80 = arith.addf %78, %79 : vector<8x128xf32>
    %81 = vector.extract_strided_slice %30 {offsets = [0, 384], sizes = [8, 128], strides = [1, 1]} : vector<8x768xf32> to vector<8x128xf32>
    %82 = vector.extract_strided_slice %81 {offsets = [0, 64], sizes = [8, 64], strides = [1, 1]} : vector<8x128xf32> to vector<8x64xf32>
    %83 = vector.extract_strided_slice %81 {offsets = [0, 0], sizes = [8, 64], strides = [1, 1]} : vector<8x128xf32> to vector<8x64xf32>
    %84 = tpu.concatenate %82, %83 in 1 : vector<8x64xf32>, vector<8x64xf32> -> vector<8x128xf32>
    %85 = arith.mulf %81, %31 : vector<8x128xf32>
    %86 = arith.mulf %84, %32 : vector<8x128xf32>
    %87 = arith.addf %85, %86 : vector<8x128xf32>
    %88 = vector.extract_strided_slice %30 {offsets = [0, 640], sizes = [8, 128], strides = [1, 1]} : vector<8x768xf32> to vector<8x128xf32>
    %89 = arith.truncf %80 : vector<8x128xf32> to vector<8x128xbf16>
    %90 = arith.truncf %87 : vector<8x128xf32> to vector<8x128xbf16>
    %cst_34 = arith.constant dense<0.000000e+00> : vector<8x8xf32>
    %91 = tpu.matmul %89, %90, %cst_34 {dimension_numbers = #tpu.dot_dimension_numbers<[1], [1], [0], [0], [0, 0, 1, 0], [], []>} : vector<8x128xbf16>, vector<8x128xbf16>, vector<8x8xf32> -> vector<8x8xf32>
    %cst_35 = arith.constant 0.0883883461 : f32
    %92 = vector.broadcast %cst_35 : f32 to vector<8x8xf32>
    %93 = arith.mulf %91, %92 : vector<8x8xf32>
    %94 = arith.addf %93, %33 : vector<8x8xf32>
    %cst_36 = arith.constant dense<0xFF800000> : vector<8xf32>
    %95 = vector.multi_reduction <maximumf>, %94, %cst_36 [1] : vector<8x8xf32> to vector<8xf32>
    %96 = vector.shape_cast %95 : vector<8xf32> to vector<8x1xf32>
    %97 = vector.broadcast %96 : vector<8x1xf32> to vector<8x8xf32>
    %98 = arith.subf %94, %97 : vector<8x8xf32>
    %99 = math.exp %98 : vector<8x8xf32>
    %cst_37 = arith.constant dense<0.000000e+00> : vector<8xf32>
    %100 = vector.multi_reduction <add>, %99, %cst_37 [1] : vector<8x8xf32> to vector<8xf32>
    %101 = vector.shape_cast %100 : vector<8xf32> to vector<8x1xf32>
    %102 = tpu.reciprocal %101 {approx = true} : vector<8x1xf32> -> vector<8x1xf32>
    %103 = vector.broadcast %102 : vector<8x1xf32> to vector<8x8xf32>
    %104 = arith.mulf %99, %103 : vector<8x8xf32>
    %105 = arith.truncf %104 : vector<8x8xf32> to vector<8x8xbf16>
    %106 = arith.truncf %88 : vector<8x128xf32> to vector<8x128xbf16>
    %cst_38 = arith.constant dense<0.000000e+00> : vector<8x128xf32>
    %107 = tpu.matmul %105, %106, %cst_38 {dimension_numbers = #tpu.dot_dimension_numbers<[1], [0], [0], [1], [0, 0, 1, 1], [], []>} : vector<8x8xbf16>, vector<8x128xbf16>, vector<8x128xf32> -> vector<8x128xf32>
    %108 = arith.truncf %107 : vector<8x128xf32> to vector<8x128xbf16>
    %c0_39 = arith.constant 0 : index
    %c128 = arith.constant 128 : index
    %c768_40 = arith.constant 768 : index
    %109 = vector.load %arg7[%c0_39, %c128, %c768_40] : memref<1x256x1792xbf16, #tpu.memory_space<vmem>>, vector<1x128x256xbf16>
    %110 = vector.shape_cast %109 : vector<1x128x256xbf16> to vector<128x256xbf16>
    %cst_41 = arith.constant dense<0.000000e+00> : vector<8x256xf32>
    %111 = tpu.matmul %108, %110, %cst_41 {dimension_numbers = #tpu.dot_dimension_numbers<[1], [0], [0], [1], [0, 0, 1, 1], [], []>} : vector<8x128xbf16>, vector<128x256xbf16>, vector<8x256xf32> -> vector<8x256xf32>
    %112 = arith.addf %73, %111 : vector<8x256xf32>
    %c0_42 = arith.constant 0 : index
    %c0_43 = arith.constant 0 : index
    %113 = vector.load %arg10[%c0_42, %c0_43] : memref<8x256xf32, #tpu.memory_space<vmem>>, vector<8x256xf32>
    %114 = arith.addf %112, %113 : vector<8x256xf32>
    %c0_44 = arith.constant 0 : index
    %c0_45 = arith.constant 0 : index
    %115 = vector.load %arg10[%c0_44, %c0_45] : memref<8x256xf32, #tpu.memory_space<vmem>>, vector<8x256xf32>
    tpu.vector_store %arg10[%c0_44, %c0_45], %114 {strides = array<i32>} : memref<8x256xf32, #tpu.memory_space<vmem>>, vector<8x256xf32>,
    %116 = arith.mulf %114, %114 : vector<8x256xf32>
    %cst_46 = arith.constant dense<0.000000e+00> : vector<8xf32>
    %117 = vector.multi_reduction <add>, %116, %cst_46 [1] : vector<8x256xf32> to vector<8xf32>
    %118 = vector.shape_cast %117 : vector<8xf32> to vector<8x1xf32>
    %cst_47 = arith.constant 2.560000e+02 : f32
    %119 = vector.broadcast %cst_47 : f32 to vector<8x1xf32>
    %120 = arith.divf %118, %119 : vector<8x1xf32>
    %cst_48 = arith.constant 9.99999997E-7 : f32
    %121 = vector.broadcast %cst_48 : f32 to vector<8x1xf32>
    %122 = arith.addf %120, %121 : vector<8x1xf32>
    %123 = math.rsqrt %122 : vector<8x1xf32>
    %124 = vector.broadcast %123 : vector<8x1xf32> to vector<8x256xf32>
    %125 = arith.mulf %114, %124 : vector<8x256xf32>
    %126 = vector.broadcast %8 : vector<1x256xf32> to vector<8x256xf32>
    %127 = arith.mulf %125, %126 : vector<8x256xf32>
    %128 = arith.truncf %127 : vector<8x256xf32> to vector<8x256xbf16>
    %c0_49 = arith.constant 0 : index
    %c0_50 = arith.constant 0 : index
    %c1024_51 = arith.constant 1024 : index
    %129 = vector.load %arg7[%c0_49, %c0_50, %c1024_51] : memref<1x256x1792xbf16, #tpu.memory_space<vmem>>, vector<1x256x512xbf16>
    %130 = vector.shape_cast %129 : vector<1x256x512xbf16> to vector<256x512xbf16>
    %cst_52 = arith.constant dense<0.000000e+00> : vector<8x512xf32>
    %131 = tpu.matmul %128, %130, %cst_52 {dimension_numbers = #tpu.dot_dimension_numbers<[1], [0], [0], [1], [0, 0, 1, 1], [], []>} : vector<8x256xbf16>, vector<256x512xbf16>, vector<8x512xf32> -> vector<8x512xf32>
    %132 = vector.extract_strided_slice %131 {offsets = [0, 0], sizes = [8, 256], strides = [1, 1]} : vector<8x512xf32> to vector<8x256xf32>
    %133 = vector.extract_strided_slice %131 {offsets = [0, 256], sizes = [8, 256], strides = [1, 1]} : vector<8x512xf32> to vector<8x256xf32>
    %134 = arith.negf %132 : vector<8x256xf32>
    %135 = math.exp %134 : vector<8x256xf32>
    %cst_53 = arith.constant 1.000000e+00 : f32
    %136 = vector.broadcast %cst_53 : f32 to vector<8x256xf32>
    %137 = arith.addf %136, %135 : vector<8x256xf32>
    %138 = arith.divf %136, %137 : vector<8x256xf32>
    %139 = arith.mulf %132, %138 : vector<8x256xf32>
    %140 = arith.mulf %139, %133 : vector<8x256xf32>
    %141 = arith.truncf %140 : vector<8x256xf32> to vector<8x256xbf16>
    %c0_54 = arith.constant 0 : index
    %c0_55 = arith.constant 0 : index
    %c1536 = arith.constant 1536 : index
    %142 = vector.load %arg7[%c0_54, %c0_55, %c1536] : memref<1x256x1792xbf16, #tpu.memory_space<vmem>>, vector<1x256x256xbf16>
    %143 = vector.shape_cast %142 : vector<1x256x256xbf16> to vector<256x256xbf16>
    %cst_56 = arith.constant dense<0.000000e+00> : vector<8x256xf32>
    %144 = tpu.matmul %141, %143, %cst_56 {dimension_numbers = #tpu.dot_dimension_numbers<[1], [0], [0], [1], [0, 0, 1, 1], [], []>} : vector<8x256xbf16>, vector<256x256xbf16>, vector<8x256xf32> -> vector<8x256xf32>
    %c0_57 = arith.constant 0 : index
    %c0_58 = arith.constant 0 : index
    %145 = vector.load %arg9[%c0_57, %c0_58] : memref<8x256xf32, #tpu.memory_space<vmem>>, vector<8x256xf32>
    tpu.vector_store %arg9[%c0_57, %c0_58], %144 {strides = array<i32>} : memref<8x256xf32, #tpu.memory_space<vmem>>, vector<8x256xf32>,
    %c1_i32 = arith.constant 1 : i32
    %146 = arith.cmpi eq, %arg0, %c1_i32 : i32
    %147 = arith.extui %146 : i1 to i32
    %c0_i32_59 = arith.constant 0 : i32
    %148 = arith.cmpi ne, %147, %c0_i32_59 : i32
    scf.if %148 {
      %c0_60 = arith.constant 0 : index
      %c0_61 = arith.constant 0 : index
      %149 = vector.load %arg10[%c0_60, %c0_61] : memref<8x256xf32, #tpu.memory_space<vmem>>, vector<8x256xf32>
      %150 = arith.addf %144, %149 : vector<8x256xf32>
      %c0_62 = arith.constant 0 : index
      %c0_63 = arith.constant 0 : index
      %151 = vector.load %arg5[%c0_62, %c0_63] : memref<1x256xf32, #tpu.memory_space<vmem>>, vector<1x256xf32>
      %152 = arith.mulf %150, %150 : vector<8x256xf32>
      %cst_64 = arith.constant dense<0.000000e+00> : vector<8xf32>
      %153 = vector.multi_reduction <add>, %152, %cst_64 [1] : vector<8x256xf32> to vector<8xf32>
      %154 = vector.shape_cast %153 : vector<8xf32> to vector<8x1xf32>
      %cst_65 = arith.constant 2.560000e+02 : f32
      %155 = vector.broadcast %cst_65 : f32 to vector<8x1xf32>
      %156 = arith.divf %154, %155 : vector<8x1xf32>
      %cst_66 = arith.constant 9.99999997E-7 : f32
      %157 = vector.broadcast %cst_66 : f32 to vector<8x1xf32>
      %158 = arith.addf %156, %157 : vector<8x1xf32>
      %159 = math.rsqrt %158 : vector<8x1xf32>
      %160 = vector.broadcast %159 : vector<8x1xf32> to vector<8x256xf32>
      %161 = arith.mulf %150, %160 : vector<8x256xf32>
      %162 = vector.broadcast %151 : vector<1x256xf32> to vector<8x256xf32>
      %163 = arith.mulf %161, %162 : vector<8x256xf32>
      %c0_67 = arith.constant 0 : index
      %c0_68 = arith.constant 0 : index
      %164 = vector.load %arg8[%c0_67, %c0_68] : memref<8x256xf32, #tpu.memory_space<vmem>>, vector<8x256xf32>
      tpu.vector_store %arg8[%c0_67, %c0_68], %163 {strides = array<i32>} : memref<8x256xf32, #tpu.memory_space<vmem>>, vector<8x256xf32>,
    } else {
    }
    return
  }
  func.func @transform_0(%arg0: i32) -> (i32, i32) {
    %c0_i32 = arith.constant 0 : i32
    %c0_i32_0 = arith.constant 0 : i32
    %c0_i32_1 = arith.constant 0 : i32
    return %c0_i32, %c0_i32_0 : i32, i32
  }
  func.func @transform_1(%arg0: i32) -> (i32, i32) {
    %c0_i32 = arith.constant 0 : i32
    %c0_i32_0 = arith.constant 0 : i32
    %c0_i32_1 = arith.constant 0 : i32
    return %c0_i32, %c0_i32_0 : i32, i32
  }
  func.func @transform_2(%arg0: i32) -> (i32, i32) {
    %c0_i32 = arith.constant 0 : i32
    %c0_i32_0 = arith.constant 0 : i32
    %c0_i32_1 = arith.constant 0 : i32
    return %c0_i32, %c0_i32_0 : i32, i32
  }
  func.func @transform_3(%arg0: i32) -> (i32, i32) {
    %c0_i32 = arith.constant 0 : i32
    %c0_i32_0 = arith.constant 0 : i32
    %c0_i32_1 = arith.constant 0 : i32
    return %c0_i32, %c0_i32_0 : i32, i32
  }
  func.func @transform_4(%arg0: i32) -> (i32, i32) {
    %c0_i32 = arith.constant 0 : i32
    %c0_i32_0 = arith.constant 0 : i32
    %c0_i32_1 = arith.constant 0 : i32
    return %c0_i32, %c0_i32_0 : i32, i32
  }
  func.func @transform_5(%arg0: i32) -> (i32, i32, i32) {
    %c0_i32 = arith.constant 0 : i32
    %c0_i32_0 = arith.constant 0 : i32
    %c0_i32_1 = arith.constant 0 : i32
    return %arg0, %c0_i32, %c0_i32_0 : i32, i32, i32
  }
  func.func @transform_6(%arg0: i32) -> (i32, i32, i32) {
    %c0_i32 = arith.constant 0 : i32
    %c0_i32_0 = arith.constant 0 : i32
    %c0_i32_1 = arith.constant 0 : i32
    return %arg0, %c0_i32, %c0_i32_0 : i32, i32, i32
  }
  func.func @transform_7(%arg0: i32) -> (i32, i32) {
    %c0_i32 = arith.constant 0 : i32
    %c0_i32_0 = arith.constant 0 : i32
    %c0_i32_1 = arith.constant 0 : i32
    return %c0_i32, %c0_i32_0 : i32, i32
  }
}

</mosaic_0001>

<llo_original>
// kernel: qwen_forward.1
$region0: #{qwen_forward.1}
  #allocation0 [shape = 'u32[]', space=smem, size = 0x4, offset = 0x4, fixed_abs, tag = 'smem constant byte address 0x4 - core index']
  #allocation1 [shape = 'u32[72,128]{1,0:T(1,128)}', space=vmem, size = 0x9000, scoped, tag = 'internal scratch']
  #allocation2 [shape = 'f32[8,256]{1,0:T(8,128)}', space=vmem, size = 0x2000, scoped, tag = 'scratch operand']
  #allocation3 [shape = 'f32[8,256]{1,0:T(8,128)}', space=vmem, size = 0x2000, scoped, tag = 'scratch operand']
  %s0 = inlined_call_operand.vmem [shape: f32[8,256], index: 0, kind: input, shape index: {}]
  %s1 = inlined_call_operand.vmem [shape: f32[8,128], index: 1, kind: input, shape index: {}]
  %s2 = inlined_call_operand.vmem [shape: f32[8,128], index: 2, kind: input, shape index: {}]
  %s3 = inlined_call_operand.vmem [shape: f32[8,8], index: 3, kind: input, shape index: {}]
  %s4 = inlined_call_operand.hbm [shape: f32[1,256], index: 4, kind: input, shape index: {}]
  %s5 = inlined_call_operand.hbm [shape: f32[2,1,1280], index: 5, kind: input, shape index: {}]
  %s6 = inlined_call_operand.hbm [shape: bf16[2,256,1792], index: 6, kind: input, shape index: {}]
  %s7 = inlined_call_operand.hbm [shape: f32[8,256], index: 7, kind: output, shape index: {}]
  %s8 = sld [smem:[#allocation0]]
  $region81: #{qwen_forward.1} parent=0
    _
  %s10 = ssub.s32 1, %s8
  %s11 = scalar_select 0, %s10, %s8
  $region1: #{qwen_forward.1} parent=0
    #allocation4 [shape = 'u8[1024]{0}', space=vmem, size = 0x400, scoped, tag = 'input window, operand 4, single buffered']
    #allocation5 [shape = 's32[2]{0}', space=sflag, size = 0x8, scoped, tag = 'scoped memory for qwen_forward.1']
    #allocation6 [shape = 's32[2]{0}', space=sflag, size = 0x8, scoped, tag = 'scoped memory for qwen_forward.1']
    #allocation7 [shape = 'u8[10240]{0}', space=vmem, size = 0x2800, scoped, tag = 'input window, operand 5']
    #allocation8 [shape = 's32[2]{0}', space=sflag, size = 0x8, scoped, tag = 'scoped memory for qwen_forward.1']
    #allocation9 [shape = 'u8[1835008]{0}', space=vmem, size = 0x1c0000, scoped, tag = 'input window, operand 6']
    #allocation10 [shape = 'u8[8192]{0}', space=vmem, size = 0x2000, scoped, tag = 'output window, operand 0, single buffered']
    %12 = vsyncpa [#allocation5], 0
    %13 = vsyncpa [#allocation8], 0
    %s14 = scalar_lea.sflag [#allocation8], 1
    %15 = vsyncpa %s14, 0
    %16 = vsyncpa [#allocation6], 0
    loop: start=0, step=1, limit=4
    $region2: #{qwen_forward.1} parent=1 // loop_pre_header
      _
    $region3: #{qwen_forward.1} parent=1 // loop_header
      %s18 = sphi 0, %s22
      %p19 = scmp.ge.s32.totalorder %s18, 4
      %s26 = sphi 0, %s26
      %s28 = sphi 0, %s26
      %s29 = sphi 0, %s28
      %s43 = sphi 0, %s29
      %s47 = sphi 0, %s47
      %s49 = sphi 0, %s47
      %s50 = sphi 0, %s49
      %s64 = sphi 0, %s50
      %s68 = sphi 0, %s68
      %s70 = sphi 0, %s68
      %s71 = sphi 0, %s70
      %s85 = sphi 0, %s71
      %s89 = sphi 0, %s89
      %s91 = sphi 0, %s89
      %s92 = sphi 0, %s91
      %s106 = sphi 0, %s92
      %s110 = sphi 0, %s110
      %s112 = sphi 0, %s110
      %s113 = sphi 0, %s112
      %s127 = sphi 0, %s113
      %s133 = sphi 0, %s135
      %s136 = sphi 0, %s133
      %s137 = sphi 0, %s136
      %s153 = sphi 0, %s137
      %s159 = sphi 0, %s161
      %s162 = sphi 0, %s159
      %s163 = sphi 0, %s162
      %s179 = sphi 0, %s163
      %s183 = sphi 0, %s183
      %s185 = sphi 0, %s183
      %s186 = sphi 0, %s185
      %s200 = sphi 0, %s186
    $region4: #{qwen_forward.1} parent=1 // loop_header_branch
      %21 = sbr.rel (%p19) target = $region8
    $region5: #{qwen_forward.1} parent=1 // loop_body
      %s23 = ssub.s32 %s18, 1
      %s24 = ssub.s32 %s18, 2
      %s25 = sadd.s32 %s18, 1
      %s27 = sadd.s32 %s26, 1
      %p30 = scmp.eq.s32.totalorder %s18, 1
      %p31 = scmp.ne.s32.totalorder %s26, %s28
      %p32 = scmp.eq.s32.totalorder %s18, 0
      %p33 = por %p31, %p32
      %p34 = scmp.ne.s32.totalorder %s26, %s28
      %p35 = scmp.eq.s32.totalorder %s23, 1
      %p36 = por %p34, %p35
      %p37 = scmp.ne.s32.totalorder %s28, %s29
      %p38 = scmp.eq.s32.totalorder %s23, 0
      %p39 = por %p37, %p38
      %p40 = scmp.ne.s32.totalorder %s28, %s29
      %p41 = scmp.eq.s32.totalorder %s24, 1
      %p42 = por %p40, %p41
      %p44 = scmp.ne.s32.totalorder %s29, %s43
      %p45 = scmp.eq.s32.totalorder %s24, 0
      %p46 = por %p44, %p45
      %s48 = sadd.s32 %s47, 1
      %p51 = scmp.eq.s32.totalorder %s18, 1
      %p52 = scmp.ne.s32.totalorder %s47, %s49
      %p53 = scmp.eq.s32.totalorder %s18, 0
      %p54 = por %p52, %p53
      %p55 = scmp.ne.s32.totalorder %s47, %s49
      %p56 = scmp.eq.s32.totalorder %s23, 1
      %p57 = por %p55, %p56
      %p58 = scmp.ne.s32.totalorder %s49, %s50
      %p59 = scmp.eq.s32.totalorder %s23, 0
      %p60 = por %p58, %p59
      %p61 = scmp.ne.s32.totalorder %s49, %s50
      %p62 = scmp.eq.s32.totalorder %s24, 1
      %p63 = por %p61, %p62
      %p65 = scmp.ne.s32.totalorder %s50, %s64
      %p66 = scmp.eq.s32.totalorder %s24, 0
      %p67 = por %p65, %p66
      %s69 = sadd.s32 %s68, 1
      %p72 = scmp.eq.s32.totalorder %s18, 1
      %p73 = scmp.ne.s32.totalorder %s68, %s70
      %p74 = scmp.eq.s32.totalorder %s18, 0
      %p75 = por %p73, %p74
      %p76 = scmp.ne.s32.totalorder %s68, %s70
      %p77 = scmp.eq.s32.totalorder %s23, 1
      %p78 = por %p76, %p77
      %p79 = scmp.ne.s32.totalorder %s70, %s71
      %p80 = scmp.eq.s32.totalorder %s23, 0
      %p81 = por %p79, %p80
      %p82 = scmp.ne.s32.totalorder %s70, %s71
      %p83 = scmp.eq.s32.totalorder %s24, 1
      %p84 = por %p82, %p83
      %p86 = scmp.ne.s32.totalorder %s71, %s85
      %p87 = scmp.eq.s32.totalorder %s24, 0
      %p88 = por %p86, %p87
      %s90 = sadd.s32 %s89, 1
      %p93 = scmp.eq.s32.totalorder %s18, 1
      %p94 = scmp.ne.s32.totalorder %s89, %s91
      %p95 = scmp.eq.s32.totalorder %s18, 0
      %p96 = por %p94, %p95
      %p97 = scmp.ne.s32.totalorder %s89, %s91
      %p98 = scmp.eq.s32.totalorder %s23, 1
      %p99 = por %p97, %p98
      %p100 = scmp.ne.s32.totalorder %s91, %s92
      %p101 = scmp.eq.s32.totalorder %s23, 0
      %p102 = por %p100, %p101
      %p103 = scmp.ne.s32.totalorder %s91, %s92
      %p104 = scmp.eq.s32.totalorder %s24, 1
      %p105 = por %p103, %p104
      %p107 = scmp.ne.s32.totalorder %s92, %s106
      %p108 = scmp.eq.s32.totalorder %s24, 0
      %p109 = por %p107, %p108
      %s111 = sadd.s32 %s110, 1
      %p114 = scmp.eq.s32.totalorder %s18, 1
      %p115 = scmp.ne.s32.totalorder %s110, %s112
      %p116 = scmp.eq.s32.totalorder %s18, 0
      %p117 = por %p115, %p116
      %p118 = scmp.ne.s32.totalorder %s110, %s112
      %p119 = scmp.eq.s32.totalorder %s23, 1
      %p120 = por %p118, %p119
      %p121 = scmp.ne.s32.totalorder %s112, %s113
      %p122 = scmp.eq.s32.totalorder %s23, 0
      %p123 = por %p121, %p122
      %p124 = scmp.ne.s32.totalorder %s112, %s113
      %p125 = scmp.eq.s32.totalorder %s24, 1
      %p126 = por %p124, %p125
      %p128 = scmp.ne.s32.totalorder %s113, %s127
      %p129 = scmp.eq.s32.totalorder %s24, 0
      %p130 = por %p128, %p129
      %s131 = ssub.s32 %s18, %s25
      %p132 = scmp.eq.s32.totalorder %s131, 0
      %s134 = sadd.s32 %s133, 1
      %s135 = scalar_select %p132, %s133, %s134
      %p138 = pneg %p132
      %p139 = scmp.eq.s32.totalorder %s18, 1
      %p140 = por %p138, %p139
      %p141 = scmp.ne.s32.totalorder %s133, %s136
      %p142 = scmp.eq.s32.totalorder %s18, 0
      %p143 = por %p141, %p142
      %p144 = scmp.ne.s32.totalorder %s133, %s136
      %p145 = scmp.eq.s32.totalorder %s23, 1
      %p146 = por %p144, %p145
      %p147 = scmp.ne.s32.totalorder %s136, %s137
      %p148 = scmp.eq.s32.totalorder %s23, 0
      %p149 = por %p147, %p148
      %p150 = scmp.ne.s32.totalorder %s136, %s137
      %p151 = scmp.eq.s32.totalorder %s24, 1
      %p152 = por %p150, %p151
      %p154 = scmp.ne.s32.totalorder %s137, %s153
      %p155 = scmp.eq.s32.totalorder %s24, 0
      %p156 = por %p154, %p155
      %s157 = ssub.s32 %s18, %s25
      %p158 = scmp.eq.s32.totalorder %s157, 0
      %s160 = sadd.s32 %s159, 1
      %s161 = scalar_select %p158, %s159, %s160
      %p164 = pneg %p158
      %p165 = scmp.eq.s32.totalorder %s18, 1
      %p166 = por %p164, %p165
      %p167 = scmp.ne.s32.totalorder %s159, %s162
      %p168 = scmp.eq.s32.totalorder %s18, 0
      %p169 = por %p167, %p168
      %p170 = scmp.ne.s32.totalorder %s159, %s162
      %p171 = scmp.eq.s32.totalorder %s23, 1
      %p172 = por %p170, %p171
      %p173 = scmp.ne.s32.totalorder %s162, %s163
      %p174 = scmp.eq.s32.totalorder %s23, 0
      %p175 = por %p173, %p174
      %p176 = scmp.ne.s32.totalorder %s162, %s163
      %p177 = scmp.eq.s32.totalorder %s24, 1
      %p178 = por %p176, %p177
      %p180 = scmp.ne.s32.totalorder %s163, %s179
      %p181 = scmp.eq.s32.totalorder %s24, 0
      %p182 = por %p180, %p181
      %s184 = sadd.s32 %s183, 1
      %p187 = scmp.eq.s32.totalorder %s18, 1
      %p188 = scmp.ne.s32.totalorder %s183, %s185
      %p189 = scmp.eq.s32.totalorder %s18, 0
      %p190 = por %p188, %p189
      %p191 = scmp.ne.s32.totalorder %s183, %s185
      %p192 = scmp.eq.s32.totalorder %s23, 1
      %p193 = por %p191, %p192
      %p194 = scmp.ne.s32.totalorder %s185, %s186
      %p195 = scmp.eq.s32.totalorder %s23, 0
      %p196 = por %p194, %p195
      %p197 = scmp.ne.s32.totalorder %s185, %s186
      %p198 = scmp.eq.s32.totalorder %s24, 1
      %p199 = por %p197, %p198
      %p201 = scmp.ne.s32.totalorder %s186, %s200
      %p202 = scmp.eq.s32.totalorder %s24, 0
      %p203 = por %p201, %p202
      %p204 = scmp.le.s32.totalorder 1, %s18
      %p205 = scmp.lt.s32.totalorder %s18, 3
      %p206 = pnand %p204, %p205
      %p207 = pneg %p206
      // Predicated region
      $region9: #{qwen_forward.1} parent=5 // pred_check
        _
      $region10: #{qwen_forward.1} parent=5 // pred_check_branch
        %209 = sbr.rel (%p206) target = $region12
      $region11: #{qwen_forward.1} parent=5 // pred_region
        %s210 = ssub.s32 %s18, 1
        // Predicated region
        $region13: #{qwen_forward.1} parent=11 // pred_check
          %p211 = pneg %p39
        $region14: #{qwen_forward.1} parent=11 // pred_check_branch
          %213 = sbr.rel (%p211) target = $region16
        $region15: #{qwen_forward.1} parent=11 // pred_region
          _
        $region16: #{qwen_forward.1} parent=11 // pred_fallthru
          _
        // Predicated region
        $region17: #{qwen_forward.1} parent=11 // pred_check
          %p214 = pneg %p60
        $region18: #{qwen_forward.1} parent=11 // pred_check_branch
          %216 = sbr.rel (%p214) target = $region20
        $region19: #{qwen_forward.1} parent=11 // pred_region
          _
        $region20: #{qwen_forward.1} parent=11 // pred_fallthru
          _
        // Predicated region
        $region21: #{qwen_forward.1} parent=11 // pred_check
          %p217 = pneg %p81
        $region22: #{qwen_forward.1} parent=11 // pred_check_branch
          %219 = sbr.rel (%p217) target = $region24
        $region23: #{qwen_forward.1} parent=11 // pred_region
          _
        $region24: #{qwen_forward.1} parent=11 // pred_fallthru
          _
        // Predicated region
        $region25: #{qwen_forward.1} parent=11 // pred_check
          %p220 = pneg %p102
        $region26: #{qwen_forward.1} parent=11 // pred_check_branch
          %222 = sbr.rel (%p220) target = $region28
        $region27: #{qwen_forward.1} parent=11 // pred_region
          _
        $region28: #{qwen_forward.1} parent=11 // pred_fallthru
          _
        // Predicated region
        $region29: #{qwen_forward.1} parent=11 // pred_check
          %p223 = pneg %p123
        $region30: #{qwen_forward.1} parent=11 // pred_check_branch
          %225 = sbr.rel (%p223) target = $region32
        $region31: #{qwen_forward.1} parent=11 // pred_region
          %227 = vsyncadd [#allocation5], 0
          %s229 = sshll.u32 %s4, 4
          %s230 = int_to_ptr.hbm [resolvable:$true] %s229
          %s231 = sshll.u32 [#allocation4], 4
          %s232 = int_to_ptr.vmem [resolvable:$true] %s231
          %234 = dma.hbm_to_vmem [thread:$0]  %s230, 32, %s232, [#allocation5]
        $region32: #{qwen_forward.1} parent=11 // pred_fallthru
          _
      $region12: #{qwen_forward.1} parent=5 // pred_fallthru
        _
      %p235 = scmp.lt.s32.totalorder %s18, 2
      // Predicated region
      $region33: #{qwen_forward.1} parent=5 // pred_check
        %p236 = pneg %p235
      $region34: #{qwen_forward.1} parent=5 // pred_check_branch
        %238 = sbr.rel (%p236) target = $region36
      $region35: #{qwen_forward.1} parent=5 // pred_region
        // Predicated region
        $region37: #{qwen_forward.1} parent=35 // pred_check
          %p239 = pneg %p143
        $region38: #{qwen_forward.1} parent=35 // pred_check_branch
          %241 = sbr.rel (%p239) target = $region40
        $region39: #{qwen_forward.1} parent=35 // pred_region
          %s242 = sand.u32 %s18, 1
          %s243 = scalar_lea.sflag [#allocation8], %s242
          %s244 = sand.u32 %s133, 1
          %s245 = smul.addr %s244, 10
          %s246 = scalar_lea.vmem [#allocation7], %s245
          %248 = vsyncadd %s243, 0
          %s249 = smul.addr %s18, 10
          %s250 = scalar_lea.hbm %s5, %s249
          %s252 = sshll.u32 %s250, 4
          %s253 = int_to_ptr.hbm [resolvable:$true] %s252
          %s254 = sshll.u32 %s246, 4
          %s255 = int_to_ptr.vmem [resolvable:$true] %s254
          %257 = dma.hbm_to_vmem [thread:$0]  %s253, 160, %s255, %s243
        $region40: #{qwen_forward.1} parent=35 // pred_fallthru
          _
        // Predicated region
        $region41: #{qwen_forward.1} parent=35 // pred_check
          %p258 = pneg %p169
        $region42: #{qwen_forward.1} parent=35 // pred_check_branch
          %260 = sbr.rel (%p258) target = $region44
        $region43: #{qwen_forward.1} parent=35 // pred_region
          %s261 = sand.u32 %s18, 1
          %s262 = scalar_lea.sflag [#allocation8], %s261
          %s263 = sand.u32 %s159, 1
          %s264 = smul.addr %s263, 1792
          %s265 = scalar_lea.vmem [#allocation9], %s264
          %267 = vsyncadd %s262, 0
          %s268 = smul.addr %s18, 448
          %s269 = smul.addr %s268, 4
          %s270 = scalar_lea.hbm %s6, %s269
          %s271 = sshll.u32 %s270, 4
          %s272 = int_to_ptr.hbm [resolvable:$true] %s271
          %s273 = sshll.u32 %s265, 4
          %s274 = int_to_ptr.vmem [resolvable:$true] %s273
          %279 = dma.hbm_to_vmem [thread:$0]  %s272, 28672, %s274, %s262, 896, 896, 56
        $region44: #{qwen_forward.1} parent=35 // pred_fallthru
          _
      $region36: #{qwen_forward.1} parent=5 // pred_fallthru
        _
      %p280 = scmp.le.s32.totalorder 1, %s18
      %p281 = scmp.lt.s32.totalorder %s18, 3
      %p282 = pnand %p280, %p281
      %p283 = pneg %p282
      // Predicated region
      $region45: #{qwen_forward.1} parent=5 // pred_check
        _
      $region46: #{qwen_forward.1} parent=5 // pred_check_branch
        %285 = sbr.rel (%p282) target = $region48
      $region47: #{qwen_forward.1} parent=5 // pred_region
        %s286 = ssub.s32 %s18, 1
        // Predicated region
        $region49: #{qwen_forward.1} parent=47 // pred_check
          %p287 = pneg %p123
        $region50: #{qwen_forward.1} parent=47 // pred_check_branch
          %289 = sbr.rel (%p287) target = $region52
        $region51: #{qwen_forward.1} parent=47 // pred_region
          %291 = dma.done [#allocation5], 32
        $region52: #{qwen_forward.1} parent=47 // pred_fallthru
          _
        %s292 = sand.u32 %s23, 1
        %s293 = scalar_lea.sflag [#allocation8], %s292
        %s294 = sand.u32 %s136, 1
        %s295 = smul.addr %s294, 10
        %s296 = scalar_lea.vmem [#allocation7], %s295
        // Predicated region
        $region53: #{qwen_forward.1} parent=47 // pred_check
          %p297 = pneg %p149
        $region54: #{qwen_forward.1} parent=47 // pred_check_branch
          %299 = sbr.rel (%p297) target = $region56
        $region55: #{qwen_forward.1} parent=47 // pred_region
          %301 = dma.done %s293, 160
        $region56: #{qwen_forward.1} parent=47 // pred_fallthru
          _
        %s302 = sand.u32 %s23, 1
        %s303 = scalar_lea.sflag [#allocation8], %s302
        %s304 = sand.u32 %s162, 1
        %s305 = smul.addr %s304, 1792
        %s306 = scalar_lea.vmem [#allocation9], %s305
        // Predicated region
        $region57: #{qwen_forward.1} parent=47 // pred_check
          %p307 = pneg %p175
        $region58: #{qwen_forward.1} parent=47 // pred_check_branch
          %309 = sbr.rel (%p307) target = $region60
        $region59: #{qwen_forward.1} parent=47 // pred_region
          %311 = dma.done %s303, 28672
        $region60: #{qwen_forward.1} parent=47 // pred_fallthru
          _
        %p312 = pneg %p39
        %p313 = pneg %p36
        %p314 = pneg %p60
        %p315 = pneg %p57
        %p316 = pneg %p81
        %p317 = pneg %p78
        %p318 = pneg %p102
        %p319 = pneg %p99
        %p320 = pneg %p123
        %p321 = pneg %p120
        %s322 = sand.u32 %s23, 1
        %s323 = scalar_lea.sflag [#allocation8], %s322
        %s324 = sand.u32 %s136, 1
        %s325 = smul.addr %s324, 10
        %s326 = scalar_lea.vmem [#allocation7], %s325
        %p327 = pneg %p149
        %p328 = pneg %p146
        %s329 = sand.u32 %s23, 1
        %s330 = scalar_lea.sflag [#allocation8], %s329
        %s331 = sand.u32 %s162, 1
        %s332 = smul.addr %s331, 1792
        %s333 = scalar_lea.vmem [#allocation9], %s332
        %p334 = pneg %p175
        %p335 = pneg %p172
        %p336 = pneg %p196
        %p337 = pneg %p193
        %p339 = scmp.eq.s32.totalorder %s23, 0
        // Predicated region
        $region61: #{qwen_forward.1} parent=47 // pred_check
          %p340 = pneg %p339
        $region62: #{qwen_forward.1} parent=47 // pred_check_branch
          %342 = sbr.rel (%p340) target = $region64
        $region63: #{qwen_forward.1} parent=47 // pred_region
          %v343 = vld [vmem:[%s0] sm:$0xff]
          %v344 = vld [vmem:[%s0 + $0x8] sm:$0xff]
          %345 = vst [vmem:[#allocation2] sm:$0xff] %v343
          %346 = vst [vmem:[#allocation2 + $0x8] sm:$0xff] %v344
          %347 = vst [vmem:[#allocation3] sm:$0xff] 0.0
          %348 = vst [vmem:[#allocation3 + $0x8] sm:$0xff] 0.0
        $region64: #{qwen_forward.1} parent=47 // pred_fallthru
          _
        %v349 = vld [vmem:[%s296] sm:$0x3]
        %v350 = vld [vmem:[%s296 + $0x2] sm:$0x3f]
        %v351 = vld [vmem:[%s296 + $0x8] sm:$0x3]
        %v352 = vld [vmem:[#allocation2] sm:$0xff]
        %v353 = vld [vmem:[#allocation2 + $0x8] sm:$0xff]
        %v354 = vld [vmem:[#allocation3] sm:$0xff]
        %v355 = vld [vmem:[#allocation3 + $0x8] sm:$0xff]
        %v356 = vadd.f32 %v352, %v354
        %v357 = vadd.f32 %v353, %v355
        %358 = vst [vmem:[#allocation3] sm:$0xff] %v356
        %359 = vst [vmem:[#allocation3 + $0x8] sm:$0xff] %v357
        %v360 = vmul.f32 %v356, %v356
        %v361 = vmul.f32 %v357, %v357
        %v362 = vadd.f32 %v360, %v361
        %363 = vadd.xlane.f32.xlu0 %v362
        %v364 = vpop.xlane.xlu0 %363
        %v365 = vrcp.pop 256.0
        %v366 = vmul.f32 256.0, %v365
        %v367 = vsub.f32 1.0, %v366
        %v368 = vmul.f32 %v365, %v367
        %v369 = vadd.f32 %v365, %v368
        %vm370 = vweird.f32 %v365
        %v371 = vsel %vm370, %v365, %v369
        %v372 = vmul.f32 %v364, %v371
        %v373 = vadd.f32 %v372, 1e-06
        %v374 = vrsqrt.pop %v373
        %v375 = vmul.f32 %v374, %v373
        %v376 = vmul.f32 %v375, %v374
        %v377 = vmul.f32 0.5, %v376
        %v378 = vsub.f32 1.5, %v377
        %v379 = vmul.f32 %v374, %v378
        %vm380 = vweird.f32 %v373
        %vm381 = vweird.f32 %v374
        %vm382 = vmor %vm380, %vm381
        %v383 = vsel %vm382, %v374, %v379
        %v384 = vmul.f32 %v356, %v383
        %v385 = vmul.f32 %v357, %v383
        %v387 = vperm.slane %v349, 0
        %v388 = vperm.slane %v349, 1
        %v391 = vmul.f32 %v384, %v387
        %v392 = vmul.f32 %v385, %v388
        %v393 = vpack.c.bf16 %v391, %v391
        %v394 = vpack.c.bf16 %v392, %v392
        %v395 = vld [vmem:[%s306] sm:$0xff]
        %v396 = vld [vmem:[%s306 + $0x8] sm:$0xff]
        %v397 = vld [vmem:[%s306 + $0x10] sm:$0xff]
        %v398 = vld [vmem:[%s306 + $0x38] sm:$0xff]
        %v399 = vld [vmem:[%s306 + $0x40] sm:$0xff]
        %v400 = vld [vmem:[%s306 + $0x48] sm:$0xff]
        %v401 = vld [vmem:[%s306 + $0x70] sm:$0xff]
        %v402 = vld [vmem:[%s306 + $0x78] sm:$0xff]
        %v403 = vld [vmem:[%s306 + $0x80] sm:$0xff]
        %v404 = vld [vmem:[%s306 + $0xa8] sm:$0xff]
        %v405 = vld [vmem:[%s306 + $0xb0] sm:$0xff]
        %v406 = vld [vmem:[%s306 + $0xb8] sm:$0xff]
        %v407 = vld [vmem:[%s306 + $0xe0] sm:$0xff]
        %v408 = vld [vmem:[%s306 + $0xe8] sm:$0xff]
        %v409 = vld [vmem:[%s306 + $0xf0] sm:$0xff]
        %v410 = vld [vmem:[%s306 + $0x118] sm:$0xff]
        %v411 = vld [vmem:[%s306 + $0x120] sm:$0xff]
        %v412 = vld [vmem:[%s306 + $0x128] sm:$0xff]
        %v413 = vld [vmem:[%s306 + $0x150] sm:$0xff]
        %v414 = vld [vmem:[%s306 + $0x158] sm:$0xff]
        %v415 = vld [vmem:[%s306 + $0x160] sm:$0xff]
        %v416 = vld [vmem:[%s306 + $0x188] sm:$0xff]
        %v417 = vld [vmem:[%s306 + $0x190] sm:$0xff]
        %v418 = vld [vmem:[%s306 + $0x198] sm:$0xff]
        %v419 = vld [vmem:[%s306 + $0x1c0] sm:$0xff]
        %v420 = vld [vmem:[%s306 + $0x1c8] sm:$0xff]
        %v421 = vld [vmem:[%s306 + $0x1d0] sm:$0xff]
        %v422 = vld [vmem:[%s306 + $0x1f8] sm:$0xff]
        %v423 = vld [vmem:[%s306 + $0x200] sm:$0xff]
        %v424 = vld [vmem:[%s306 + $0x208] sm:$0xff]
        %v425 = vld [vmem:[%s306 + $0x230] sm:$0xff]
        %v426 = vld [vmem:[%s306 + $0x238] sm:$0xff]
        %v427 = vld [vmem:[%s306 + $0x240] sm:$0xff]
        %v428 = vld [vmem:[%s306 + $0x268] sm:$0xff]
        %v429 = vld [vmem:[%s306 + $0x270] sm:$0xff]
        %v430 = vld [vmem:[%s306 + $0x278] sm:$0xff]
        %v431 = vld [vmem:[%s306 + $0x2a0] sm:$0xff]
        %v432 = vld [vmem:[%s306 + $0x2a8] sm:$0xff]
        %v433 = vld [vmem:[%s306 + $0x2b0] sm:$0xff]
        %v434 = vld [vmem:[%s306 + $0x2d8] sm:$0xff]
        %v435 = vld [vmem:[%s306 + $0x2e0] sm:$0xff]
        %v436 = vld [vmem:[%s306 + $0x2e8] sm:$0xff]
        %v437 = vld [vmem:[%s306 + $0x310] sm:$0xff]
        %v438 = vld [vmem:[%s306 + $0x318] sm:$0xff]
        %v439 = vld [vmem:[%s306 + $0x320] sm:$0xff]
        %v440 = vld [vmem:[%s306 + $0x348] sm:$0xff]
        %v441 = vld [vmem:[%s306 + $0x350] sm:$0xff]
        %v442 = vld [vmem:[%s306 + $0x358] sm:$0xff]
        %v443 = vld [vmem:[%s306 + $0x380] sm:$0xff]
        %v444 = vld [vmem:[%s306 + $0x388] sm:$0xff]
        %v445 = vld [vmem:[%s306 + $0x390] sm:$0xff]
        %v446 = vld [vmem:[%s306 + $0x3b8] sm:$0xff]
        %v447 = vld [vmem:[%s306 + $0x3c0] sm:$0xff]
        %v448 = vld [vmem:[%s306 + $0x3c8] sm:$0xff]
        %v449 = vld [vmem:[%s306 + $0x3f0] sm:$0xff]
        %v450 = vld [vmem:[%s306 + $0x3f8] sm:$0xff]
        %v451 = vld [vmem:[%s306 + $0x400] sm:$0xff]
        %v452 = vld [vmem:[%s306 + $0x428] sm:$0xff]
        %v453 = vld [vmem:[%s306 + $0x430] sm:$0xff]
        %v454 = vld [vmem:[%s306 + $0x438] sm:$0xff]
        %v455 = vld [vmem:[%s306 + $0x460] sm:$0xff]
        %v456 = vld [vmem:[%s306 + $0x468] sm:$0xff]
        %v457 = vld [vmem:[%s306 + $0x470] sm:$0xff]
        %v458 = vld [vmem:[%s306 + $0x498] sm:$0xff]
        %v459 = vld [vmem:[%s306 + $0x4a0] sm:$0xff]
        %v460 = vld [vmem:[%s306 + $0x4a8] sm:$0xff]
        %v461 = vld [vmem:[%s306 + $0x4d0] sm:$0xff]
        %v462 = vld [vmem:[%s306 + $0x4d8] sm:$0xff]
        %v463 = vld [vmem:[%s306 + $0x4e0] sm:$0xff]
        %v464 = vld [vmem:[%s306 + $0x508] sm:$0xff]
        %v465 = vld [vmem:[%s306 + $0x510] sm:$0xff]
        %v466 = vld [vmem:[%s306 + $0x518] sm:$0xff]
        %v467 = vld [vmem:[%s306 + $0x540] sm:$0xff]
        %v468 = vld [vmem:[%s306 + $0x548] sm:$0xff]
        %v469 = vld [vmem:[%s306 + $0x550] sm:$0xff]
        %v470 = vld [vmem:[%s306 + $0x578] sm:$0xff]
        %v471 = vld [vmem:[%s306 + $0x580] sm:$0xff]
        %v472 = vld [vmem:[%s306 + $0x588] sm:$0xff]
        %v473 = vld [vmem:[%s306 + $0x5b0] sm:$0xff]
        %v474 = vld [vmem:[%s306 + $0x5b8] sm:$0xff]
        %v475 = vld [vmem:[%s306 + $0x5c0] sm:$0xff]
        %v476 = vld [vmem:[%s306 + $0x5e8] sm:$0xff]
        %v477 = vld [vmem:[%s306 + $0x5f0] sm:$0xff]
        %v478 = vld [vmem:[%s306 + $0x5f8] sm:$0xff]
        %v479 = vld [vmem:[%s306 + $0x620] sm:$0xff]
        %v480 = vld [vmem:[%s306 + $0x628] sm:$0xff]
        %v481 = vld [vmem:[%s306 + $0x630] sm:$0xff]
        %v482 = vld [vmem:[%s306 + $0x658] sm:$0xff]
        %v483 = vld [vmem:[%s306 + $0x660] sm:$0xff]
        %v484 = vld [vmem:[%s306 + $0x668] sm:$0xff]
        %v485 = vld [vmem:[%s306 + $0x690] sm:$0xff]
        %v486 = vld [vmem:[%s306 + $0x698] sm:$0xff]
        %v487 = vld [vmem:[%s306 + $0x6a0] sm:$0xff]
        %v488 = vld [vmem:[%s306 + $0x6c8] sm:$0xff]
        %v489 = vld [vmem:[%s306 + $0x6d0] sm:$0xff]
        %v490 = vld [vmem:[%s306 + $0x6d8] sm:$0xff]
        %v492 = vperm.slane %v350, 0
        %v493 = vperm.slane %v350, 1
        %v494 = vperm.slane %v350, 2
        %v495 = vperm.slane %v350, 3
        %v496 = vperm.slane %v350, 4
        %v497 = vperm.slane %v350, 5
        %v600 = vunpack.c.l.b16 %v395
        %v601 = vunpack.c.h.b16 %v395
        %v602 = vunpack.c.l.b16 %v396
        %v603 = vunpack.c.h.b16 %v396
        %v604 = vunpack.c.l.b16 %v397
        %v605 = vunpack.c.h.b16 %v397
        %v606 = vunpack.c.l.b16 %v398
        %v607 = vunpack.c.h.b16 %v398
        %v608 = vunpack.c.l.b16 %v399
        %v609 = vunpack.c.h.b16 %v399
        %v610 = vunpack.c.l.b16 %v400
        %v611 = vunpack.c.h.b16 %v400
        %v612 = vunpack.c.l.b16 %v401
        %v613 = vunpack.c.h.b16 %v401
        %v614 = vunpack.c.l.b16 %v402
        %v615 = vunpack.c.h.b16 %v402
        %v616 = vunpack.c.l.b16 %v403
        %v617 = vunpack.c.h.b16 %v403
        %v618 = vunpack.c.l.b16 %v404
        %v619 = vunpack.c.h.b16 %v404
        %v620 = vunpack.c.l.b16 %v405
        %v621 = vunpack.c.h.b16 %v405
        %v622 = vunpack.c.l.b16 %v406
        %v623 = vunpack.c.h.b16 %v406
        %v624 = vunpack.c.l.b16 %v407
        %v625 = vunpack.c.h.b16 %v407
        %v626 = vunpack.c.l.b16 %v408
        %v627 = vunpack.c.h.b16 %v408
        %v628 = vunpack.c.l.b16 %v409
        %v629 = vunpack.c.h.b16 %v409
        %v630 = vunpack.c.l.b16 %v410
        %v631 = vunpack.c.h.b16 %v410
        %v632 = vunpack.c.l.b16 %v411
        %v633 = vunpack.c.h.b16 %v411
        %v634 = vunpack.c.l.b16 %v412
        %v635 = vunpack.c.h.b16 %v412
        %v636 = vunpack.c.l.b16 %v413
        %v637 = vunpack.c.h.b16 %v413
        %v638 = vunpack.c.l.b16 %v414
        %v639 = vunpack.c.h.b16 %v414
        %v640 = vunpack.c.l.b16 %v415
        %v641 = vunpack.c.h.b16 %v415
        %v642 = vunpack.c.l.b16 %v416
        %v643 = vunpack.c.h.b16 %v416
        %v644 = vunpack.c.l.b16 %v417
        %v645 = vunpack.c.h.b16 %v417
        %v646 = vunpack.c.l.b16 %v418
        %v647 = vunpack.c.h.b16 %v418
        %v648 = vunpack.c.l.b16 %v419
        %v649 = vunpack.c.h.b16 %v419
        %v650 = vunpack.c.l.b16 %v420
        %v651 = vunpack.c.h.b16 %v420
        %v652 = vunpack.c.l.b16 %v421
        %v653 = vunpack.c.h.b16 %v421
        %v654 = vunpack.c.l.b16 %v422
        %v655 = vunpack.c.h.b16 %v422
        %v656 = vunpack.c.l.b16 %v423
        %v657 = vunpack.c.h.b16 %v423
        %v658 = vunpack.c.l.b16 %v424
        %v659 = vunpack.c.h.b16 %v424
        %v660 = vunpack.c.l.b16 %v425
        %v661 = vunpack.c.h.b16 %v425
        %v662 = vunpack.c.l.b16 %v426
        %v663 = vunpack.c.h.b16 %v426
        %v664 = vunpack.c.l.b16 %v427
        %v665 = vunpack.c.h.b16 %v427
        %v666 = vunpack.c.l.b16 %v428
        %v667 = vunpack.c.h.b16 %v428
        %v668 = vunpack.c.l.b16 %v429
        %v669 = vunpack.c.h.b16 %v429
        %v670 = vunpack.c.l.b16 %v430
        %v671 = vunpack.c.h.b16 %v430
        %v672 = vunpack.c.l.b16 %v431
        %v673 = vunpack.c.h.b16 %v431
        %v674 = vunpack.c.l.b16 %v432
        %v675 = vunpack.c.h.b16 %v432
        %v676 = vunpack.c.l.b16 %v433
        %v677 = vunpack.c.h.b16 %v433
        %v678 = vunpack.c.l.b16 %v434
        %v679 = vunpack.c.h.b16 %v434
        %v680 = vunpack.c.l.b16 %v435
        %v681 = vunpack.c.h.b16 %v435
        %v682 = vunpack.c.l.b16 %v436
        %v683 = vunpack.c.h.b16 %v436
        %v684 = vunpack.c.l.b16 %v437
        %v685 = vunpack.c.h.b16 %v437
        %v686 = vunpack.c.l.b16 %v438
        %v687 = vunpack.c.h.b16 %v438
        %v688 = vunpack.c.l.b16 %v439
        %v689 = vunpack.c.h.b16 %v439
        %v690 = vunpack.c.l.b16 %v440
        %v691 = vunpack.c.h.b16 %v440
        %v692 = vunpack.c.l.b16 %v441
        %v693 = vunpack.c.h.b16 %v441
        %v694 = vunpack.c.l.b16 %v442
        %v695 = vunpack.c.h.b16 %v442
        %v696 = vunpack.c.l.b16 %v443
        %v697 = vunpack.c.h.b16 %v443
        %v698 = vunpack.c.l.b16 %v444
        %v699 = vunpack.c.h.b16 %v444
        %v700 = vunpack.c.l.b16 %v445
        %v701 = vunpack.c.h.b16 %v445
        %v702 = vunpack.c.l.b16 %v446
        %v703 = vunpack.c.h.b16 %v446
        %v704 = vunpack.c.l.b16 %v447
        %v705 = vunpack.c.h.b16 %v447
        %v706 = vunpack.c.l.b16 %v448
        %v707 = vunpack.c.h.b16 %v448
        %v708 = vunpack.c.l.b16 %v449
        %v709 = vunpack.c.h.b16 %v449
        %v710 = vunpack.c.l.b16 %v450
        %v711 = vunpack.c.h.b16 %v450
        %v712 = vunpack.c.l.b16 %v451
        %v713 = vunpack.c.h.b16 %v451
        %v714 = vunpack.c.l.b16 %v452
        %v715 = vunpack.c.h.b16 %v452
        %v716 = vunpack.c.l.b16 %v453
        %v717 = vunpack.c.h.b16 %v453
        %v718 = vunpack.c.l.b16 %v454
        %v719 = vunpack.c.h.b16 %v454
        %v720 = vunpack.c.l.b16 %v455
        %v721 = vunpack.c.h.b16 %v455
        %v722 = vunpack.c.l.b16 %v456
        %v723 = vunpack.c.h.b16 %v456
        %v724 = vunpack.c.l.b16 %v457
        %v725 = vunpack.c.h.b16 %v457
        %v726 = vunpack.c.l.b16 %v458
        %v727 = vunpack.c.h.b16 %v458
        %v728 = vunpack.c.l.b16 %v459
        %v729 = vunpack.c.h.b16 %v459
        %v730 = vunpack.c.l.b16 %v460
        %v731 = vunpack.c.h.b16 %v460
        %v732 = vunpack.c.l.b16 %v461
        %v733 = vunpack.c.h.b16 %v461
        %v734 = vunpack.c.l.b16 %v462
        %v735 = vunpack.c.h.b16 %v462
        %v736 = vunpack.c.l.b16 %v463
        %v737 = vunpack.c.h.b16 %v463
        %v738 = vunpack.c.l.b16 %v464
        %v739 = vunpack.c.h.b16 %v464
        %v740 = vunpack.c.l.b16 %v465
        %v741 = vunpack.c.h.b16 %v465
        %v742 = vunpack.c.l.b16 %v466
        %v743 = vunpack.c.h.b16 %v466
        %v744 = vunpack.c.l.b16 %v467
        %v745 = vunpack.c.h.b16 %v467
        %v746 = vunpack.c.l.b16 %v468
        %v747 = vunpack.c.h.b16 %v468
        %v748 = vunpack.c.l.b16 %v469
        %v749 = vunpack.c.h.b16 %v469
        %v750 = vunpack.c.l.b16 %v470
        %v751 = vunpack.c.h.b16 %v470
        %v752 = vunpack.c.l.b16 %v471
        %v753 = vunpack.c.h.b16 %v471
        %v754 = vunpack.c.l.b16 %v472
        %v755 = vunpack.c.h.b16 %v472
        %v756 = vunpack.c.l.b16 %v473
        %v757 = vunpack.c.h.b16 %v473
        %v758 = vunpack.c.l.b16 %v474
        %v759 = vunpack.c.h.b16 %v474
        %v760 = vunpack.c.l.b16 %v475
        %v761 = vunpack.c.h.b16 %v475
        %v762 = vunpack.c.l.b16 %v476
        %v763 = vunpack.c.h.b16 %v476
        %v764 = vunpack.c.l.b16 %v477
        %v765 = vunpack.c.h.b16 %v477
        %v766 = vunpack.c.l.b16 %v478
        %v767 = vunpack.c.h.b16 %v478
        %v768 = vunpack.c.l.b16 %v479
        %v769 = vunpack.c.h.b16 %v479
        %v770 = vunpack.c.l.b16 %v480
        %v771 = vunpack.c.h.b16 %v480
        %v772 = vunpack.c.l.b16 %v481
        %v773 = vunpack.c.h.b16 %v481
        %v774 = vunpack.c.l.b16 %v482
        %v775 = vunpack.c.h.b16 %v482
        %v776 = vunpack.c.l.b16 %v483
        %v777 = vunpack.c.h.b16 %v483
        %v778 = vunpack.c.l.b16 %v484
        %v779 = vunpack.c.h.b16 %v484
        %v780 = vunpack.c.l.b16 %v485
        %v781 = vunpack.c.h.b16 %v485
        %v782 = vunpack.c.l.b16 %v486
        %v783 = vunpack.c.h.b16 %v486
        %v784 = vunpack.c.l.b16 %v487
        %v785 = vunpack.c.h.b16 %v487
        %v786 = vunpack.c.l.b16 %v488
        %v787 = vunpack.c.h.b16 %v488
        %v788 = vunpack.c.l.b16 %v489
        %v789 = vunpack.c.h.b16 %v489
        %v790 = vunpack.c.l.b16 %v490
        %v791 = vunpack.c.h.b16 %v490
        %v792 = vpack.c.b16 %v606, %v600
        %v793 = vpack.c.b16 %v607, %v601
        %v794 = vpack.c.b16 %v608, %v602
        %v795 = vpack.c.b16 %v609, %v603
        %v796 = vpack.c.b16 %v610, %v604
        %v797 = vpack.c.b16 %v611, %v605
        %v798 = vpack.c.b16 %v618, %v612
        %v799 = vpack.c.b16 %v619, %v613
        %v800 = vpack.c.b16 %v620, %v614
        %v801 = vpack.c.b16 %v621, %v615
        %v802 = vpack.c.b16 %v622, %v616
        %v803 = vpack.c.b16 %v623, %v617
        %v804 = vpack.c.b16 %v630, %v624
        %v805 = vpack.c.b16 %v631, %v625
        %v806 = vpack.c.b16 %v632, %v626
        %v807 = vpack.c.b16 %v633, %v627
        %v808 = vpack.c.b16 %v634, %v628
        %v809 = vpack.c.b16 %v635, %v629
        %v810 = vpack.c.b16 %v642, %v636
        %v811 = vpack.c.b16 %v643, %v637
        %v812 = vpack.c.b16 %v644, %v638
        %v813 = vpack.c.b16 %v645, %v639
        %v814 = vpack.c.b16 %v646, %v640
        %v815 = vpack.c.b16 %v647, %v641
        %v816 = vpack.c.b16 %v654, %v648
        %v817 = vpack.c.b16 %v655, %v649
        %v818 = vpack.c.b16 %v656, %v650
        %v819 = vpack.c.b16 %v657, %v651
        %v820 = vpack.c.b16 %v658, %v652
        %v821 = vpack.c.b16 %v659, %v653
        %v822 = vpack.c.b16 %v666, %v660
        %v823 = vpack.c.b16 %v667, %v661
        %v824 = vpack.c.b16 %v668, %v662
        %v825 = vpack.c.b16 %v669, %v663
        %v826 = vpack.c.b16 %v670, %v664
        %v827 = vpack.c.b16 %v671, %v665
        %v828 = vpack.c.b16 %v678, %v672
        %v829 = vpack.c.b16 %v679, %v673
        %v830 = vpack.c.b16 %v680, %v674
        %v831 = vpack.c.b16 %v681, %v675
        %v832 = vpack.c.b16 %v682, %v676
        %v833 = vpack.c.b16 %v683, %v677
        %v834 = vpack.c.b16 %v690, %v684
        %v835 = vpack.c.b16 %v691, %v685
        %v836 = vpack.c.b16 %v692, %v686
        %v837 = vpack.c.b16 %v693, %v687
        %v838 = vpack.c.b16 %v694, %v688
        %v839 = vpack.c.b16 %v695, %v689
        %v840 = vpack.c.b16 %v702, %v696
        %v841 = vpack.c.b16 %v703, %v697
        %v842 = vpack.c.b16 %v704, %v698
        %v843 = vpack.c.b16 %v705, %v699
        %v844 = vpack.c.b16 %v706, %v700
        %v845 = vpack.c.b16 %v707, %v701
        %v846 = vpack.c.b16 %v714, %v708
        %v847 = vpack.c.b16 %v715, %v709
        %v848 = vpack.c.b16 %v716, %v710
        %v849 = vpack.c.b16 %v717, %v711
        %v850 = vpack.c.b16 %v718, %v712
        %v851 = vpack.c.b16 %v719, %v713
        %v852 = vpack.c.b16 %v726, %v720
        %v853 = vpack.c.b16 %v727, %v721
        %v854 = vpack.c.b16 %v728, %v722
        %v855 = vpack.c.b16 %v729, %v723
        %v856 = vpack.c.b16 %v730, %v724
        %v857 = vpack.c.b16 %v731, %v725
        %v858 = vpack.c.b16 %v738, %v732
        %v859 = vpack.c.b16 %v739, %v733
        %v860 = vpack.c.b16 %v740, %v734
        %v861 = vpack.c.b16 %v741, %v735
        %v862 = vpack.c.b16 %v742, %v736
        %v863 = vpack.c.b16 %v743, %v737
        %v864 = vpack.c.b16 %v750, %v744
        %v865 = vpack.c.b16 %v751, %v745
        %v866 = vpack.c.b16 %v752, %v746
        %v867 = vpack.c.b16 %v753, %v747
        %v868 = vpack.c.b16 %v754, %v748
        %v869 = vpack.c.b16 %v755, %v749
        %v870 = vpack.c.b16 %v762, %v756
        %v871 = vpack.c.b16 %v763, %v757
        %v872 = vpack.c.b16 %v764, %v758
        %v873 = vpack.c.b16 %v765, %v759
        %v874 = vpack.c.b16 %v766, %v760
        %v875 = vpack.c.b16 %v767, %v761
        %v876 = vpack.c.b16 %v774, %v768
        %v877 = vpack.c.b16 %v775, %v769
        %v878 = vpack.c.b16 %v776, %v770
        %v879 = vpack.c.b16 %v777, %v771
        %v880 = vpack.c.b16 %v778, %v772
        %v881 = vpack.c.b16 %v779, %v773
        %v882 = vpack.c.b16 %v786, %v780
        %v883 = vpack.c.b16 %v787, %v781
        %v884 = vpack.c.b16 %v788, %v782
        %v885 = vpack.c.b16 %v789, %v783
        %v886 = vpack.c.b16 %v790, %v784
        %v887 = vpack.c.b16 %v791, %v785
        %984 = vmatpush.bf16.msra.mxu0 %v834
        %985 = vmatpush.bf16.msra.mxu0 %v828
        %986 = vmatpush.bf16.msra.mxu0 %v822
        %987 = vmatpush.bf16.msra.mxu0 %v816
        %988 = vmatpush.bf16.msra.mxu0 %v810
        %989 = vmatpush.bf16.msra.mxu0 %v804
        %990 = vmatpush.bf16.msra.mxu0 %v798
        %991 = vmatpush.bf16.msra.mxu0 %v792
        %992 = vmatmul.bf16.gmra.mxu0 %v393
        %v993 = vpop.f32.mrf.mxu0
        %v994 = vadd.f32 %v492, %v993
        %v995 = vpop.f32.mrf.mxu0
        %996 = vdwg.mxu0
        %997 = vmatpush.bf16.msra.mxu0 %v882
        %998 = vmatpush.bf16.msra.mxu0 %v876
        %999 = vmatpush.bf16.msra.mxu0 %v870
        %1000 = vmatpush.bf16.msra.mxu0 %v864
        %1001 = vmatpush.bf16.msra.mxu0 %v858
        %1002 = vmatpush.bf16.msra.mxu0 %v852
        %1003 = vmatpush.bf16.msra.mxu0 %v846
        %1004 = vmatpush.bf16.msra.mxu0 %v840
        %1005 = vmatmul.bf16.gmra.mxu0 %v394
        %v1006 = vpop.f32.mrf.mxu0
        %v1007 = vadd.f32 %v994, %v1006
        %v1008 = vpop.f32.mrf.mxu0
        %1009 = vdwg.mxu0
        %1010 = vmatpush.bf16.msra.mxu0 %v835
        %1011 = vmatpush.bf16.msra.mxu0 %v829
        %1012 = vmatpush.bf16.msra.mxu0 %v823
        %1013 = vmatpush.bf16.msra.mxu0 %v817
        %1014 = vmatpush.bf16.msra.mxu0 %v811
        %1015 = vmatpush.bf16.msra.mxu0 %v805
        %1016 = vmatpush.bf16.msra.mxu0 %v799
        %1017 = vmatpush.bf16.msra.mxu0 %v793
        %1018 = vmatmul.bf16.gmra.mxu0 %v393
        %v1019 = vpop.f32.mrf.mxu0
        %v1020 = vadd.f32 %v493, %v1019
        %v1021 = vpop.f32.mrf.mxu0
        %1022 = vdwg.mxu0
        %1023 = vmatpush.bf16.msra.mxu0 %v883
        %1024 = vmatpush.bf16.msra.mxu0 %v877
        %1025 = vmatpush.bf16.msra.mxu0 %v871
        %1026 = vmatpush.bf16.msra.mxu0 %v865
        %1027 = vmatpush.bf16.msra.mxu0 %v859
        %1028 = vmatpush.bf16.msra.mxu0 %v853
        %1029 = vmatpush.bf16.msra.mxu0 %v847
        %1030 = vmatpush.bf16.msra.mxu0 %v841
        %1031 = vmatmul.bf16.gmra.mxu0 %v394
        %v1032 = vpop.f32.mrf.mxu0
        %v1033 = vadd.f32 %v1020, %v1032
        %v1034 = vpop.f32.mrf.mxu0
        %1035 = vdwg.mxu0
        %1036 = vmatpush.bf16.msra.mxu0 %v836
        %1037 = vmatpush.bf16.msra.mxu0 %v830
        %1038 = vmatpush.bf16.msra.mxu0 %v824
        %1039 = vmatpush.bf16.msra.mxu0 %v818
        %1040 = vmatpush.bf16.msra.mxu0 %v812
        %1041 = vmatpush.bf16.msra.mxu0 %v806
        %1042 = vmatpush.bf16.msra.mxu0 %v800
        %1043 = vmatpush.bf16.msra.mxu0 %v794
        %1044 = vmatmul.bf16.gmra.mxu0 %v393
        %v1045 = vpop.f32.mrf.mxu0
        %v1046 = vadd.f32 %v494, %v1045
        %v1047 = vpop.f32.mrf.mxu0
        %1048 = vdwg.mxu0
        %1049 = vmatpush.bf16.msra.mxu0 %v884
        %1050 = vmatpush.bf16.msra.mxu0 %v878
        %1051 = vmatpush.bf16.msra.mxu0 %v872
        %1052 = vmatpush.bf16.msra.mxu0 %v866
        %1053 = vmatpush.bf16.msra.mxu0 %v860
        %1054 = vmatpush.bf16.msra.mxu0 %v854
        %1055 = vmatpush.bf16.msra.mxu0 %v848
        %1056 = vmatpush.bf16.msra.mxu0 %v842
        %1057 = vmatmul.bf16.gmra.mxu0 %v394
        %v1058 = vpop.f32.mrf.mxu0
        %v1059 = vadd.f32 %v1046, %v1058
        %v1060 = vpop.f32.mrf.mxu0
        %1061 = vdwg.mxu0
        %1062 = vmatpush.bf16.msra.mxu0 %v837
        %1063 = vmatpush.bf16.msra.mxu0 %v831
        %1064 = vmatpush.bf16.msra.mxu0 %v825
        %1065 = vmatpush.bf16.msra.mxu0 %v819
        %1066 = vmatpush.bf16.msra.mxu0 %v813
        %1067 = vmatpush.bf16.msra.mxu0 %v807
        %1068 = vmatpush.bf16.msra.mxu0 %v801
        %1069 = vmatpush.bf16.msra.mxu0 %v795
        %1070 = vmatmul.bf16.gmra.mxu0 %v393
        %v1071 = vpop.f32.mrf.mxu0
        %v1072 = vadd.f32 %v495, %v1071
        %v1073 = vpop.f32.mrf.mxu0
        %1074 = vdwg.mxu0
        %1075 = vmatpush.bf16.msra.mxu0 %v885
        %1076 = vmatpush.bf16.msra.mxu0 %v879
        %1077 = vmatpush.bf16.msra.mxu0 %v873
        %1078 = vmatpush.bf16.msra.mxu0 %v867
        %1079 = vmatpush.bf16.msra.mxu0 %v861
        %1080 = vmatpush.bf16.msra.mxu0 %v855
        %1081 = vmatpush.bf16.msra.mxu0 %v849
        %1082 = vmatpush.bf16.msra.mxu0 %v843
        %1083 = vmatmul.bf16.gmra.mxu0 %v394
        %v1084 = vpop.f32.mrf.mxu0
        %v1085 = vadd.f32 %v1072, %v1084
        %v1086 = vpop.f32.mrf.mxu0
        %1087 = vdwg.mxu0
        %1088 = vmatpush.bf16.msra.mxu0 %v838
        %1089 = vmatpush.bf16.msra.mxu0 %v832
        %1090 = vmatpush.bf16.msra.mxu0 %v826
        %1091 = vmatpush.bf16.msra.mxu0 %v820
        %1092 = vmatpush.bf16.msra.mxu0 %v814
        %1093 = vmatpush.bf16.msra.mxu0 %v808
        %1094 = vmatpush.bf16.msra.mxu0 %v802
        %1095 = vmatpush.bf16.msra.mxu0 %v796
        %1096 = vmatmul.bf16.gmra.mxu0 %v393
        %v1097 = vpop.f32.mrf.mxu0
        %v1098 = vadd.f32 %v496, %v1097
        %v1099 = vpop.f32.mrf.mxu0
        %1100 = vdwg.mxu0
        %1101 = vmatpush.bf16.msra.mxu0 %v886
        %1102 = vmatpush.bf16.msra.mxu0 %v880
        %1103 = vmatpush.bf16.msra.mxu0 %v874
        %1104 = vmatpush.bf16.msra.mxu0 %v868
        %1105 = vmatpush.bf16.msra.mxu0 %v862
        %1106 = vmatpush.bf16.msra.mxu0 %v856
        %1107 = vmatpush.bf16.msra.mxu0 %v850
        %1108 = vmatpush.bf16.msra.mxu0 %v844
        %1109 = vmatmul.bf16.gmra.mxu0 %v394
        %v1110 = vpop.f32.mrf.mxu0
        %v1111 = vadd.f32 %v1098, %v1110
        %v1112 = vpop.f32.mrf.mxu0
        %1113 = vdwg.mxu0
        %1114 = vmatpush.bf16.msra.mxu0 %v839
        %1115 = vmatpush.bf16.msra.mxu0 %v833
        %1116 = vmatpush.bf16.msra.mxu0 %v827
        %1117 = vmatpush.bf16.msra.mxu0 %v821
        %1118 = vmatpush.bf16.msra.mxu0 %v815
        %1119 = vmatpush.bf16.msra.mxu0 %v809
        %1120 = vmatpush.bf16.msra.mxu0 %v803
        %1121 = vmatpush.bf16.msra.mxu0 %v797
        %1122 = vmatmul.bf16.gmra.mxu0 %v393
        %v1123 = vpop.f32.mrf.mxu0
        %v1124 = vadd.f32 %v497, %v1123
        %v1125 = vpop.f32.mrf.mxu0
        %1126 = vdwg.mxu0
        %1127 = vmatpush.bf16.msra.mxu0 %v887
        %1128 = vmatpush.bf16.msra.mxu0 %v881
        %1129 = vmatpush.bf16.msra.mxu0 %v875
        %1130 = vmatpush.bf16.msra.mxu0 %v869
        %1131 = vmatpush.bf16.msra.mxu0 %v863
        %1132 = vmatpush.bf16.msra.mxu0 %v857
        %1133 = vmatpush.bf16.msra.mxu0 %v851
        %1134 = vmatpush.bf16.msra.mxu0 %v845
        %1135 = vmatmul.bf16.gmra.mxu0 %v394
        %v1136 = vpop.f32.mrf.mxu0
        %v1137 = vadd.f32 %v1124, %v1136
        %v1138 = vpop.f32.mrf.mxu0
        %1139 = vdwg.mxu0
        %v1140 = vld [vmem:[%s1] sm:$0xff]
        %v1141 = vld [vmem:[%s2] sm:$0xff]
        %v1142 = vld [vmem:[%s3] sm:$0xff]
        %1144 = vrot.lane.b32.xlu0 %v1007, 64
        %v1145 = vpop.permute.xlu0 %1144
        %v1147 = vmul.f32 %v1007, %v1140
        %v1148 = vmul.f32 %v1145, %v1141
        %v1149 = vadd.f32 %v1147, %v1148
        %1151 = vrot.lane.b32.xlu0 %v1059, 64
        %v1152 = vpop.permute.xlu0 %1151
        %v1154 = vmul.f32 %v1059, %v1140
        %v1155 = vmul.f32 %v1152, %v1141
        %v1156 = vadd.f32 %v1154, %v1155
        %v1157 = vpack.c.bf16 %v1149, %v1149
        %v1158 = vpack.c.bf16 %v1156, %v1156
        %1159 = vmatpush.bf16.xpose.msra.mxu0 0
        %1160 = vmatpush.bf16.xpose.msra.mxu0 0
        %1161 = vmatpush.bf16.xpose.msra.mxu0 0
        %1162 = vmatpush.bf16.xpose.msra.mxu0 0
        %1163 = vmatpush.bf16.xpose.msra.mxu0 0
        %1164 = vmatpush.bf16.xpose.msra.mxu0 0
        %1165 = vmatpush.bf16.xpose.msra.mxu0 0
        %1166 = vmatpush.bf16.xpose.msra.mxu0 %v1158
        %1167 = vmatmul.bf16.gmra.mxu0 %v1157
        %v1168 = vpop.f32.mrf.mxu0
        %v1169 = vadd.f32 0.0, %v1168
        %v1170 = vpop.f32.mrf.mxu0
        %1171 = vdwg.mxu0
        %v1172 = vmul.f32 %v1169, 0.088388346
        %v1173 = vadd.f32 %v1172, %v1142
        %vm1174 = vcmask 64512
        %v1175 = vsel %vm1174, %v1173, -inf
        %1176 = vmax.xlane.f32.xlu0 %v1175
        %v1177 = vpop.xlane.xlu0 %1176
        %v1178 = vsub.f32 %v1173, %v1177
        %v1179 = vmul.f32 %v1178, 1.442695
        %v1180 = vpow.pop %v1179
        %v1181 = vsel %vm1174, %v1180, 0.0
        %1182 = vadd.xlane.f32.xlu0 %v1181
        %v1183 = vpop.xlane.xlu0 %1182
        %v1184 = vrcp.pop %v1183
        %v1185 = vmul.f32 %v1180, %v1184
        %v1186 = vpack.c.bf16 %v1185, %v1185
        %v1187 = vpack.c.bf16 %v1111, %v1111
        %v1189 = vsel %vm1174, %v1186, 0
        %vm1191 = vcmask 1043456
        %v1193 = vsel %vm1191, %v1187, 0
        %1195 = vmatpush.bf16.msra.mxu0 0
        %1196 = vmatpush.bf16.msra.mxu0 0
        %1197 = vmatpush.bf16.msra.mxu0 0
        %1198 = vmatpush.bf16.msra.mxu0 0
        %1199 = vmatpush.bf16.msra.mxu0 0
        %1200 = vmatpush.bf16.msra.mxu0 0
        %1201 = vmatpush.bf16.msra.mxu0 0
        %1202 = vmatpush.bf16.msra.mxu0 %v1193
        %1203 = vmatmul.bf16.gmra.mxu0 %v1189
        %v1204 = vpop.f32.mrf.mxu0
        %v1205 = vadd.f32 0.0, %v1204
        %v1206 = vpop.f32.mrf.mxu0
        %1207 = vdwg.mxu0
        %v1208 = vpack.c.bf16 %v1205, %v1205
        %v1209 = vld [vmem:[%s306 + $0x18] sm:$0xff]
        %v1210 = vld [vmem:[%s306 + $0x50] sm:$0xff]
        %v1211 = vld [vmem:[%s306 + $0x88] sm:$0xff]
        %v1212 = vld [vmem:[%s306 + $0xc0] sm:$0xff]
        %v1213 = vld [vmem:[%s306 + $0xf8] sm:$0xff]
        %v1214 = vld [vmem:[%s306 + $0x130] sm:$0xff]
        %v1215 = vld [vmem:[%s306 + $0x168] sm:$0xff]
        %v1216 = vld [vmem:[%s306 + $0x1a0] sm:$0xff]
        %v1217 = vld [vmem:[%s306 + $0x1d8] sm:$0xff]
        %v1218 = vld [vmem:[%s306 + $0x210] sm:$0xff]
        %v1219 = vld [vmem:[%s306 + $0x248] sm:$0xff]
        %v1220 = vld [vmem:[%s306 + $0x280] sm:$0xff]
        %v1221 = vld [vmem:[%s306 + $0x2b8] sm:$0xff]
        %v1222 = vld [vmem:[%s306 + $0x2f0] sm:$0xff]
        %v1223 = vld [vmem:[%s306 + $0x328] sm:$0xff]
        %v1224 = vld [vmem:[%s306 + $0x360] sm:$0xff]
        %1226 = vrot.lane.b32.xlu0 %v1033, 64
        %v1227 = vpop.permute.xlu0 %1226
        %v1229 = vmul.f32 %v1033, %v1140
        %v1230 = vmul.f32 %v1227, %v1141
        %v1231 = vadd.f32 %v1229, %v1230
        %1233 = vrot.lane.b32.xlu0 %v1085, 64
        %v1234 = vpop.permute.xlu0 %1233
        %v1236 = vmul.f32 %v1085, %v1140
        %v1237 = vmul.f32 %v1234, %v1141
        %v1238 = vadd.f32 %v1236, %v1237
        %v1239 = vpack.c.bf16 %v1231, %v1231
        %v1240 = vpack.c.bf16 %v1238, %v1238
        %1241 = vmatpush.bf16.xpose.msra.mxu0 0
        %1242 = vmatpush.bf16.xpose.msra.mxu0 0
        %1243 = vmatpush.bf16.xpose.msra.mxu0 0
        %1244 = vmatpush.bf16.xpose.msra.mxu0 0
        %1245 = vmatpush.bf16.xpose.msra.mxu0 0
        %1246 = vmatpush.bf16.xpose.msra.mxu0 0
        %1247 = vmatpush.bf16.xpose.msra.mxu0 0
        %1248 = vmatpush.bf16.xpose.msra.mxu0 %v1240
        %1249 = vmatmul.bf16.gmra.mxu0 %v1239
        %v1250 = vpop.f32.mrf.mxu0
        %v1251 = vadd.f32 0.0, %v1250
        %v1252 = vpop.f32.mrf.mxu0
        %1253 = vdwg.mxu0
        %v1254 = vmul.f32 %v1251, 0.088388346
        %v1255 = vadd.f32 %v1254, %v1142
        %v1256 = vsel %vm1174, %v1255, -inf
        %1257 = vmax.xlane.f32.xlu0 %v1256
        %v1258 = vpop.xlane.xlu0 %1257
        %v1259 = vsub.f32 %v1255, %v1258
        %v1260 = vmul.f32 %v1259, 1.442695
        %v1261 = vpow.pop %v1260
        %v1262 = vsel %vm1174, %v1261, 0.0
        %1263 = vadd.xlane.f32.xlu0 %v1262
        %v1264 = vpop.xlane.xlu0 %1263
        %v1265 = vrcp.pop %v1264
        %v1266 = vmul.f32 %v1261, %v1265
        %v1267 = vpack.c.bf16 %v1266, %v1266
        %v1268 = vpack.c.bf16 %v1137, %v1137
        %v1270 = vsel %vm1174, %v1267, 0
        %v1273 = vsel %vm1191, %v1268, 0
        %1275 = vmatpush.bf16.msra.mxu0 0
        %1276 = vmatpush.bf16.msra.mxu0 0
        %1277 = vmatpush.bf16.msra.mxu0 0
        %1278 = vmatpush.bf16.msra.mxu0 0
        %1279 = vmatpush.bf16.msra.mxu0 0
        %1280 = vmatpush.bf16.msra.mxu0 0
        %1281 = vmatpush.bf16.msra.mxu0 0
        %1282 = vmatpush.bf16.msra.mxu0 %v1273
        %1283 = vmatmul.bf16.gmra.mxu0 %v1270
        %v1284 = vpop.f32.mrf.mxu0
        %v1285 = vadd.f32 0.0, %v1284
        %v1286 = vpop.f32.mrf.mxu0
        %1287 = vdwg.mxu0
        %v1288 = vpack.c.bf16 %v1285, %v1285
        %v1289 = vld [vmem:[%s306 + $0x398] sm:$0xff]
        %v1290 = vld [vmem:[%s306 + $0x3d0] sm:$0xff]
        %v1291 = vld [vmem:[%s306 + $0x408] sm:$0xff]
        %v1292 = vld [vmem:[%s306 + $0x440] sm:$0xff]
        %v1293 = vld [vmem:[%s306 + $0x478] sm:$0xff]
        %v1294 = vld [vmem:[%s306 + $0x4b0] sm:$0xff]
        %v1295 = vld [vmem:[%s306 + $0x4e8] sm:$0xff]
        %v1296 = vld [vmem:[%s306 + $0x520] sm:$0xff]
        %v1297 = vld [vmem:[%s306 + $0x558] sm:$0xff]
        %v1298 = vld [vmem:[%s306 + $0x590] sm:$0xff]
        %v1299 = vld [vmem:[%s306 + $0x5c8] sm:$0xff]
        %v1300 = vld [vmem:[%s306 + $0x600] sm:$0xff]
        %v1301 = vld [vmem:[%s306 + $0x638] sm:$0xff]
        %v1302 = vld [vmem:[%s306 + $0x670] sm:$0xff]
        %v1303 = vld [vmem:[%s306 + $0x6a8] sm:$0xff]
        %v1304 = vld [vmem:[%s306 + $0x6e0] sm:$0xff]
        %v1321 = vunpack.c.l.b16 %v1289
        %v1322 = vunpack.c.h.b16 %v1289
        %v1323 = vunpack.c.l.b16 %v1290
        %v1324 = vunpack.c.h.b16 %v1290
        %v1325 = vunpack.c.l.b16 %v1291
        %v1326 = vunpack.c.h.b16 %v1291
        %v1327 = vunpack.c.l.b16 %v1292
        %v1328 = vunpack.c.h.b16 %v1292
        %v1329 = vunpack.c.l.b16 %v1293
        %v1330 = vunpack.c.h.b16 %v1293
        %v1331 = vunpack.c.l.b16 %v1294
        %v1332 = vunpack.c.h.b16 %v1294
        %v1333 = vunpack.c.l.b16 %v1295
        %v1334 = vunpack.c.h.b16 %v1295
        %v1335 = vunpack.c.l.b16 %v1296
        %v1336 = vunpack.c.h.b16 %v1296
        %v1337 = vunpack.c.l.b16 %v1297
        %v1338 = vunpack.c.h.b16 %v1297
        %v1339 = vunpack.c.l.b16 %v1298
        %v1340 = vunpack.c.h.b16 %v1298
        %v1341 = vunpack.c.l.b16 %v1299
        %v1342 = vunpack.c.h.b16 %v1299
        %v1343 = vunpack.c.l.b16 %v1300
        %v1344 = vunpack.c.h.b16 %v1300
        %v1345 = vunpack.c.l.b16 %v1301
        %v1346 = vunpack.c.h.b16 %v1301
        %v1347 = vunpack.c.l.b16 %v1302
        %v1348 = vunpack.c.h.b16 %v1302
        %v1349 = vunpack.c.l.b16 %v1303
        %v1350 = vunpack.c.h.b16 %v1303
        %v1351 = vunpack.c.l.b16 %v1304
        %v1352 = vunpack.c.h.b16 %v1304
        %v1353 = vpack.c.b16 %v1323, %v1321
        %v1354 = vpack.c.b16 %v1324, %v1322
        %v1355 = vpack.c.b16 %v1327, %v1325
        %v1356 = vpack.c.b16 %v1328, %v1326
        %v1357 = vpack.c.b16 %v1331, %v1329
        %v1358 = vpack.c.b16 %v1332, %v1330
        %v1359 = vpack.c.b16 %v1335, %v1333
        %v1360 = vpack.c.b16 %v1336, %v1334
        %v1361 = vpack.c.b16 %v1339, %v1337
        %v1362 = vpack.c.b16 %v1340, %v1338
        %v1363 = vpack.c.b16 %v1343, %v1341
        %v1364 = vpack.c.b16 %v1344, %v1342
        %v1365 = vpack.c.b16 %v1347, %v1345
        %v1366 = vpack.c.b16 %v1348, %v1346
        %v1367 = vpack.c.b16 %v1351, %v1349
        %v1368 = vpack.c.b16 %v1352, %v1350
        %1385 = vmatpush.bf16.msra.mxu0 %v1367
        %1386 = vmatpush.bf16.msra.mxu0 %v1365
        %1387 = vmatpush.bf16.msra.mxu0 %v1363
        %1388 = vmatpush.bf16.msra.mxu0 %v1361
        %1389 = vmatpush.bf16.msra.mxu0 %v1359
        %1390 = vmatpush.bf16.msra.mxu0 %v1357
        %1391 = vmatpush.bf16.msra.mxu0 %v1355
        %1392 = vmatpush.bf16.msra.mxu0 %v1353
        %1393 = vmatmul.bf16.gmra.mxu0 %v1288
        %v1394 = vpop.f32.mrf.mxu0
        %v1395 = vadd.f32 0.0, %v1394
        %v1396 = vpop.f32.mrf.mxu0
        %1397 = vdwg.mxu0
        %1398 = vmatpush.bf16.msra.mxu0 %v1368
        %1399 = vmatpush.bf16.msra.mxu0 %v1366
        %1400 = vmatpush.bf16.msra.mxu0 %v1364
        %1401 = vmatpush.bf16.msra.mxu0 %v1362
        %1402 = vmatpush.bf16.msra.mxu0 %v1360
        %1403 = vmatpush.bf16.msra.mxu0 %v1358
        %1404 = vmatpush.bf16.msra.mxu0 %v1356
        %1405 = vmatpush.bf16.msra.mxu0 %v1354
        %1406 = vmatmul.bf16.gmra.mxu0 %v1288
        %v1407 = vpop.f32.mrf.mxu0
        %v1408 = vadd.f32 0.0, %v1407
        %v1409 = vpop.f32.mrf.mxu0
        %1410 = vdwg.mxu0
        %v1427 = vunpack.c.l.b16 %v1209
        %v1428 = vunpack.c.h.b16 %v1209
        %v1429 = vunpack.c.l.b16 %v1210
        %v1430 = vunpack.c.h.b16 %v1210
        %v1431 = vunpack.c.l.b16 %v1211
        %v1432 = vunpack.c.h.b16 %v1211
        %v1433 = vunpack.c.l.b16 %v1212
        %v1434 = vunpack.c.h.b16 %v1212
        %v1435 = vunpack.c.l.b16 %v1213
        %v1436 = vunpack.c.h.b16 %v1213
        %v1437 = vunpack.c.l.b16 %v1214
        %v1438 = vunpack.c.h.b16 %v1214
        %v1439 = vunpack.c.l.b16 %v1215
        %v1440 = vunpack.c.h.b16 %v1215
        %v1441 = vunpack.c.l.b16 %v1216
        %v1442 = vunpack.c.h.b16 %v1216
        %v1443 = vunpack.c.l.b16 %v1217
        %v1444 = vunpack.c.h.b16 %v1217
        %v1445 = vunpack.c.l.b16 %v1218
        %v1446 = vunpack.c.h.b16 %v1218
        %v1447 = vunpack.c.l.b16 %v1219
        %v1448 = vunpack.c.h.b16 %v1219
        %v1449 = vunpack.c.l.b16 %v1220
        %v1450 = vunpack.c.h.b16 %v1220
        %v1451 = vunpack.c.l.b16 %v1221
        %v1452 = vunpack.c.h.b16 %v1221
        %v1453 = vunpack.c.l.b16 %v1222
        %v1454 = vunpack.c.h.b16 %v1222
        %v1455 = vunpack.c.l.b16 %v1223
        %v1456 = vunpack.c.h.b16 %v1223
        %v1457 = vunpack.c.l.b16 %v1224
        %v1458 = vunpack.c.h.b16 %v1224
        %v1459 = vpack.c.b16 %v1429, %v1427
        %v1460 = vpack.c.b16 %v1430, %v1428
        %v1461 = vpack.c.b16 %v1433, %v1431
        %v1462 = vpack.c.b16 %v1434, %v1432
        %v1463 = vpack.c.b16 %v1437, %v1435
        %v1464 = vpack.c.b16 %v1438, %v1436
        %v1465 = vpack.c.b16 %v1441, %v1439
        %v1466 = vpack.c.b16 %v1442, %v1440
        %v1467 = vpack.c.b16 %v1445, %v1443
        %v1468 = vpack.c.b16 %v1446, %v1444
        %v1469 = vpack.c.b16 %v1449, %v1447
        %v1470 = vpack.c.b16 %v1450, %v1448
        %v1471 = vpack.c.b16 %v1453, %v1451
        %v1472 = vpack.c.b16 %v1454, %v1452
        %v1473 = vpack.c.b16 %v1457, %v1455
        %v1474 = vpack.c.b16 %v1458, %v1456
        %1491 = vmatpush.bf16.msra.mxu0 %v1473
        %1492 = vmatpush.bf16.msra.mxu0 %v1471
        %1493 = vmatpush.bf16.msra.mxu0 %v1469
        %1494 = vmatpush.bf16.msra.mxu0 %v1467
        %1495 = vmatpush.bf16.msra.mxu0 %v1465
        %1496 = vmatpush.bf16.msra.mxu0 %v1463
        %1497 = vmatpush.bf16.msra.mxu0 %v1461
        %1498 = vmatpush.bf16.msra.mxu0 %v1459
        %1499 = vmatmul.bf16.gmra.mxu0 %v1208
        %v1500 = vpop.f32.mrf.mxu0
        %v1501 = vadd.f32 %v1395, %v1500
        %v1502 = vpop.f32.mrf.mxu0
        %1503 = vdwg.mxu0
        %1504 = vmatpush.bf16.msra.mxu0 %v1474
        %1505 = vmatpush.bf16.msra.mxu0 %v1472
        %1506 = vmatpush.bf16.msra.mxu0 %v1470
        %1507 = vmatpush.bf16.msra.mxu0 %v1468
        %1508 = vmatpush.bf16.msra.mxu0 %v1466
        %1509 = vmatpush.bf16.msra.mxu0 %v1464
        %1510 = vmatpush.bf16.msra.mxu0 %v1462
        %1511 = vmatpush.bf16.msra.mxu0 %v1460
        %1512 = vmatmul.bf16.gmra.mxu0 %v1208
        %v1513 = vpop.f32.mrf.mxu0
        %v1514 = vadd.f32 %v1408, %v1513
        %v1515 = vpop.f32.mrf.mxu0
        %1516 = vdwg.mxu0
        %v1517 = vld [vmem:[#allocation3] sm:$0xff]
        %v1518 = vld [vmem:[#allocation3 + $0x8] sm:$0xff]
        %v1519 = vadd.f32 %v1501, %v1517
        %v1520 = vadd.f32 %v1514, %v1518
        %1521 = vst [vmem:[#allocation3] sm:$0xff] %v1519
        %1522 = vst [vmem:[#allocation3 + $0x8] sm:$0xff] %v1520
        %v1523 = vmul.f32 %v1519, %v1519
        %v1524 = vmul.f32 %v1520, %v1520
        %v1525 = vadd.f32 %v1523, %v1524
        %1526 = vadd.xlane.f32.xlu0 %v1525
        %v1527 = vpop.xlane.xlu0 %1526
        %v1528 = vmul.f32 %v1527, %v371
        %v1529 = vadd.f32 %v1528, 1e-06
        %v1530 = vrsqrt.pop %v1529
        %v1531 = vmul.f32 %v1530, %v1529
        %v1532 = vmul.f32 %v1531, %v1530
        %v1533 = vmul.f32 0.5, %v1532
        %v1534 = vsub.f32 1.5, %v1533
        %v1535 = vmul.f32 %v1530, %v1534
        %vm1536 = vweird.f32 %v1529
        %vm1537 = vweird.f32 %v1530
        %vm1538 = vmor %vm1536, %vm1537
        %v1539 = vsel %vm1538, %v1530, %v1535
        %v1540 = vmul.f32 %v1519, %v1539
        %v1541 = vmul.f32 %v1520, %v1539
        %v1543 = vperm.slane %v351, 0
        %v1544 = vperm.slane %v351, 1
        %v1547 = vmul.f32 %v1540, %v1543
        %v1548 = vmul.f32 %v1541, %v1544
        %v1549 = vpack.c.bf16 %v1547, %v1547
        %v1550 = vpack.c.bf16 %v1548, %v1548
        %v1551 = vld [vmem:[%s306 + $0x20] sm:$0xff]
        %v1552 = vld [vmem:[%s306 + $0x28] sm:$0xff]
        %v1553 = vld [vmem:[%s306 + $0x58] sm:$0xff]
        %v1554 = vld [vmem:[%s306 + $0x60] sm:$0xff]
        %v1555 = vld [vmem:[%s306 + $0x90] sm:$0xff]
        %v1556 = vld [vmem:[%s306 + $0x98] sm:$0xff]
        %v1557 = vld [vmem:[%s306 + $0xc8] sm:$0xff]
        %v1558 = vld [vmem:[%s306 + $0xd0] sm:$0xff]
        %v1559 = vld [vmem:[%s306 + $0x100] sm:$0xff]
        %v1560 = vld [vmem:[%s306 + $0x108] sm:$0xff]
        %v1561 = vld [vmem:[%s306 + $0x138] sm:$0xff]
        %v1562 = vld [vmem:[%s306 + $0x140] sm:$0xff]
        %v1563 = vld [vmem:[%s306 + $0x170] sm:$0xff]
        %v1564 = vld [vmem:[%s306 + $0x178] sm:$0xff]
        %v1565 = vld [vmem:[%s306 + $0x1a8] sm:$0xff]
        %v1566 = vld [vmem:[%s306 + $0x1b0] sm:$0xff]
        %v1567 = vld [vmem:[%s306 + $0x1e0] sm:$0xff]
        %v1568 = vld [vmem:[%s306 + $0x1e8] sm:$0xff]
        %v1569 = vld [vmem:[%s306 + $0x218] sm:$0xff]
        %v1570 = vld [vmem:[%s306 + $0x220] sm:$0xff]
        %v1571 = vld [vmem:[%s306 + $0x250] sm:$0xff]
        %v1572 = vld [vmem:[%s306 + $0x258] sm:$0xff]
        %v1573 = vld [vmem:[%s306 + $0x288] sm:$0xff]
        %v1574 = vld [vmem:[%s306 + $0x290] sm:$0xff]
        %v1575 = vld [vmem:[%s306 + $0x2c0] sm:$0xff]
        %v1576 = vld [vmem:[%s306 + $0x2c8] sm:$0xff]
        %v1577 = vld [vmem:[%s306 + $0x2f8] sm:$0xff]
        %v1578 = vld [vmem:[%s306 + $0x300] sm:$0xff]
        %v1579 = vld [vmem:[%s306 + $0x330] sm:$0xff]
        %v1580 = vld [vmem:[%s306 + $0x338] sm:$0xff]
        %v1581 = vld [vmem:[%s306 + $0x368] sm:$0xff]
        %v1582 = vld [vmem:[%s306 + $0x370] sm:$0xff]
        %v1583 = vld [vmem:[%s306 + $0x3a0] sm:$0xff]
        %v1584 = vld [vmem:[%s306 + $0x3a8] sm:$0xff]
        %v1585 = vld [vmem:[%s306 + $0x3d8] sm:$0xff]
        %v1586 = vld [vmem:[%s306 + $0x3e0] sm:$0xff]
        %v1587 = vld [vmem:[%s306 + $0x410] sm:$0xff]
        %v1588 = vld [vmem:[%s306 + $0x418] sm:$0xff]
        %v1589 = vld [vmem:[%s306 + $0x448] sm:$0xff]
        %v1590 = vld [vmem:[%s306 + $0x450] sm:$0xff]
        %v1591 = vld [vmem:[%s306 + $0x480] sm:$0xff]
        %v1592 = vld [vmem:[%s306 + $0x488] sm:$0xff]
        %v1593 = vld [vmem:[%s306 + $0x4b8] sm:$0xff]
        %v1594 = vld [vmem:[%s306 + $0x4c0] sm:$0xff]
        %v1595 = vld [vmem:[%s306 + $0x4f0] sm:$0xff]
        %v1596 = vld [vmem:[%s306 + $0x4f8] sm:$0xff]
        %v1597 = vld [vmem:[%s306 + $0x528] sm:$0xff]
        %v1598 = vld [vmem:[%s306 + $0x530] sm:$0xff]
        %v1599 = vld [vmem:[%s306 + $0x560] sm:$0xff]
        %v1600 = vld [vmem:[%s306 + $0x568] sm:$0xff]
        %v1601 = vld [vmem:[%s306 + $0x598] sm:$0xff]
        %v1602 = vld [vmem:[%s306 + $0x5a0] sm:$0xff]
        %v1603 = vld [vmem:[%s306 + $0x5d0] sm:$0xff]
        %v1604 = vld [vmem:[%s306 + $0x5d8] sm:$0xff]
        %v1605 = vld [vmem:[%s306 + $0x608] sm:$0xff]
        %v1606 = vld [vmem:[%s306 + $0x610] sm:$0xff]
        %v1607 = vld [vmem:[%s306 + $0x640] sm:$0xff]
        %v1608 = vld [vmem:[%s306 + $0x648] sm:$0xff]
        %v1609 = vld [vmem:[%s306 + $0x678] sm:$0xff]
        %v1610 = vld [vmem:[%s306 + $0x680] sm:$0xff]
        %v1611 = vld [vmem:[%s306 + $0x6b0] sm:$0xff]
        %v1612 = vld [vmem:[%s306 + $0x6b8] sm:$0xff]
        %v1613 = vld [vmem:[%s306 + $0x6e8] sm:$0xff]
        %v1614 = vld [vmem:[%s306 + $0x6f0] sm:$0xff]
        %v1679 = vunpack.c.l.b16 %v1551
        %v1680 = vunpack.c.h.b16 %v1551
        %v1681 = vunpack.c.l.b16 %v1552
        %v1682 = vunpack.c.h.b16 %v1552
        %v1683 = vunpack.c.l.b16 %v1553
        %v1684 = vunpack.c.h.b16 %v1553
        %v1685 = vunpack.c.l.b16 %v1554
        %v1686 = vunpack.c.h.b16 %v1554
        %v1687 = vunpack.c.l.b16 %v1555
        %v1688 = vunpack.c.h.b16 %v1555
        %v1689 = vunpack.c.l.b16 %v1556
        %v1690 = vunpack.c.h.b16 %v1556
        %v1691 = vunpack.c.l.b16 %v1557
        %v1692 = vunpack.c.h.b16 %v1557
        %v1693 = vunpack.c.l.b16 %v1558
        %v1694 = vunpack.c.h.b16 %v1558
        %v1695 = vunpack.c.l.b16 %v1559
        %v1696 = vunpack.c.h.b16 %v1559
        %v1697 = vunpack.c.l.b16 %v1560
        %v1698 = vunpack.c.h.b16 %v1560
        %v1699 = vunpack.c.l.b16 %v1561
        %v1700 = vunpack.c.h.b16 %v1561
        %v1701 = vunpack.c.l.b16 %v1562
        %v1702 = vunpack.c.h.b16 %v1562
        %v1703 = vunpack.c.l.b16 %v1563
        %v1704 = vunpack.c.h.b16 %v1563
        %v1705 = vunpack.c.l.b16 %v1564
        %v1706 = vunpack.c.h.b16 %v1564
        %v1707 = vunpack.c.l.b16 %v1565
        %v1708 = vunpack.c.h.b16 %v1565
        %v1709 = vunpack.c.l.b16 %v1566
        %v1710 = vunpack.c.h.b16 %v1566
        %v1711 = vunpack.c.l.b16 %v1567
        %v1712 = vunpack.c.h.b16 %v1567
        %v1713 = vunpack.c.l.b16 %v1568
        %v1714 = vunpack.c.h.b16 %v1568
        %v1715 = vunpack.c.l.b16 %v1569
        %v1716 = vunpack.c.h.b16 %v1569
        %v1717 = vunpack.c.l.b16 %v1570
        %v1718 = vunpack.c.h.b16 %v1570
        %v1719 = vunpack.c.l.b16 %v1571
        %v1720 = vunpack.c.h.b16 %v1571
        %v1721 = vunpack.c.l.b16 %v1572
        %v1722 = vunpack.c.h.b16 %v1572
        %v1723 = vunpack.c.l.b16 %v1573
        %v1724 = vunpack.c.h.b16 %v1573
        %v1725 = vunpack.c.l.b16 %v1574
        %v1726 = vunpack.c.h.b16 %v1574
        %v1727 = vunpack.c.l.b16 %v1575
        %v1728 = vunpack.c.h.b16 %v1575
        %v1729 = vunpack.c.l.b16 %v1576
        %v1730 = vunpack.c.h.b16 %v1576
        %v1731 = vunpack.c.l.b16 %v1577
        %v1732 = vunpack.c.h.b16 %v1577
        %v1733 = vunpack.c.l.b16 %v1578
        %v1734 = vunpack.c.h.b16 %v1578
        %v1735 = vunpack.c.l.b16 %v1579
        %v1736 = vunpack.c.h.b16 %v1579
        %v1737 = vunpack.c.l.b16 %v1580
        %v1738 = vunpack.c.h.b16 %v1580
        %v1739 = vunpack.c.l.b16 %v1581
        %v1740 = vunpack.c.h.b16 %v1581
        %v1741 = vunpack.c.l.b16 %v1582
        %v1742 = vunpack.c.h.b16 %v1582
        %v1743 = vunpack.c.l.b16 %v1583
        %v1744 = vunpack.c.h.b16 %v1583
        %v1745 = vunpack.c.l.b16 %v1584
        %v1746 = vunpack.c.h.b16 %v1584
        %v1747 = vunpack.c.l.b16 %v1585
        %v1748 = vunpack.c.h.b16 %v1585
        %v1749 = vunpack.c.l.b16 %v1586
        %v1750 = vunpack.c.h.b16 %v1586
        %v1751 = vunpack.c.l.b16 %v1587
        %v1752 = vunpack.c.h.b16 %v1587
        %v1753 = vunpack.c.l.b16 %v1588
        %v1754 = vunpack.c.h.b16 %v1588
        %v1755 = vunpack.c.l.b16 %v1589
        %v1756 = vunpack.c.h.b16 %v1589
        %v1757 = vunpack.c.l.b16 %v1590
        %v1758 = vunpack.c.h.b16 %v1590
        %v1759 = vunpack.c.l.b16 %v1591
        %v1760 = vunpack.c.h.b16 %v1591
        %v1761 = vunpack.c.l.b16 %v1592
        %v1762 = vunpack.c.h.b16 %v1592
        %v1763 = vunpack.c.l.b16 %v1593
        %v1764 = vunpack.c.h.b16 %v1593
        %v1765 = vunpack.c.l.b16 %v1594
        %v1766 = vunpack.c.h.b16 %v1594
        %v1767 = vunpack.c.l.b16 %v1595
        %v1768 = vunpack.c.h.b16 %v1595
        %v1769 = vunpack.c.l.b16 %v1596
        %v1770 = vunpack.c.h.b16 %v1596
        %v1771 = vunpack.c.l.b16 %v1597
        %v1772 = vunpack.c.h.b16 %v1597
        %v1773 = vunpack.c.l.b16 %v1598
        %v1774 = vunpack.c.h.b16 %v1598
        %v1775 = vunpack.c.l.b16 %v1599
        %v1776 = vunpack.c.h.b16 %v1599
        %v1777 = vunpack.c.l.b16 %v1600
        %v1778 = vunpack.c.h.b16 %v1600
        %v1779 = vunpack.c.l.b16 %v1601
        %v1780 = vunpack.c.h.b16 %v1601
        %v1781 = vunpack.c.l.b16 %v1602
        %v1782 = vunpack.c.h.b16 %v1602
        %v1783 = vunpack.c.l.b16 %v1603
        %v1784 = vunpack.c.h.b16 %v1603
        %v1785 = vunpack.c.l.b16 %v1604
        %v1786 = vunpack.c.h.b16 %v1604
        %v1787 = vunpack.c.l.b16 %v1605
        %v1788 = vunpack.c.h.b16 %v1605
        %v1789 = vunpack.c.l.b16 %v1606
        %v1790 = vunpack.c.h.b16 %v1606
        %v1791 = vunpack.c.l.b16 %v1607
        %v1792 = vunpack.c.h.b16 %v1607
        %v1793 = vunpack.c.l.b16 %v1608
        %v1794 = vunpack.c.h.b16 %v1608
        %v1795 = vunpack.c.l.b16 %v1609
        %v1796 = vunpack.c.h.b16 %v1609
        %v1797 = vunpack.c.l.b16 %v1610
        %v1798 = vunpack.c.h.b16 %v1610
        %v1799 = vunpack.c.l.b16 %v1611
        %v1800 = vunpack.c.h.b16 %v1611
        %v1801 = vunpack.c.l.b16 %v1612
        %v1802 = vunpack.c.h.b16 %v1612
        %v1803 = vunpack.c.l.b16 %v1613
        %v1804 = vunpack.c.h.b16 %v1613
        %v1805 = vunpack.c.l.b16 %v1614
        %v1806 = vunpack.c.h.b16 %v1614
        %v1807 = vpack.c.b16 %v1683, %v1679
        %v1808 = vpack.c.b16 %v1684, %v1680
        %v1809 = vpack.c.b16 %v1685, %v1681
        %v1810 = vpack.c.b16 %v1686, %v1682
        %v1811 = vpack.c.b16 %v1691, %v1687
        %v1812 = vpack.c.b16 %v1692, %v1688
        %v1813 = vpack.c.b16 %v1693, %v1689
        %v1814 = vpack.c.b16 %v1694, %v1690
        %v1815 = vpack.c.b16 %v1699, %v1695
        %v1816 = vpack.c.b16 %v1700, %v1696
        %v1817 = vpack.c.b16 %v1701, %v1697
        %v1818 = vpack.c.b16 %v1702, %v1698
        %v1819 = vpack.c.b16 %v1707, %v1703
        %v1820 = vpack.c.b16 %v1708, %v1704
        %v1821 = vpack.c.b16 %v1709, %v1705
        %v1822 = vpack.c.b16 %v1710, %v1706
        %v1823 = vpack.c.b16 %v1715, %v1711
        %v1824 = vpack.c.b16 %v1716, %v1712
        %v1825 = vpack.c.b16 %v1717, %v1713
        %v1826 = vpack.c.b16 %v1718, %v1714
        %v1827 = vpack.c.b16 %v1723, %v1719
        %v1828 = vpack.c.b16 %v1724, %v1720
        %v1829 = vpack.c.b16 %v1725, %v1721
        %v1830 = vpack.c.b16 %v1726, %v1722
        %v1831 = vpack.c.b16 %v1731, %v1727
        %v1832 = vpack.c.b16 %v1732, %v1728
        %v1833 = vpack.c.b16 %v1733, %v1729
        %v1834 = vpack.c.b16 %v1734, %v1730
        %v1835 = vpack.c.b16 %v1739, %v1735
        %v1836 = vpack.c.b16 %v1740, %v1736
        %v1837 = vpack.c.b16 %v1741, %v1737
        %v1838 = vpack.c.b16 %v1742, %v1738
        %v1839 = vpack.c.b16 %v1747, %v1743
        %v1840 = vpack.c.b16 %v1748, %v1744
        %v1841 = vpack.c.b16 %v1749, %v1745
        %v1842 = vpack.c.b16 %v1750, %v1746
        %v1843 = vpack.c.b16 %v1755, %v1751
        %v1844 = vpack.c.b16 %v1756, %v1752
        %v1845 = vpack.c.b16 %v1757, %v1753
        %v1846 = vpack.c.b16 %v1758, %v1754
        %v1847 = vpack.c.b16 %v1763, %v1759
        %v1848 = vpack.c.b16 %v1764, %v1760
        %v1849 = vpack.c.b16 %v1765, %v1761
        %v1850 = vpack.c.b16 %v1766, %v1762
        %v1851 = vpack.c.b16 %v1771, %v1767
        %v1852 = vpack.c.b16 %v1772, %v1768
        %v1853 = vpack.c.b16 %v1773, %v1769
        %v1854 = vpack.c.b16 %v1774, %v1770
        %v1855 = vpack.c.b16 %v1779, %v1775
        %v1856 = vpack.c.b16 %v1780, %v1776
        %v1857 = vpack.c.b16 %v1781, %v1777
        %v1858 = vpack.c.b16 %v1782, %v1778
        %v1859 = vpack.c.b16 %v1787, %v1783
        %v1860 = vpack.c.b16 %v1788, %v1784
        %v1861 = vpack.c.b16 %v1789, %v1785
        %v1862 = vpack.c.b16 %v1790, %v1786
        %v1863 = vpack.c.b16 %v1795, %v1791
        %v1864 = vpack.c.b16 %v1796, %v1792
        %v1865 = vpack.c.b16 %v1797, %v1793
        %v1866 = vpack.c.b16 %v1798, %v1794
        %v1867 = vpack.c.b16 %v1803, %v1799
        %v1868 = vpack.c.b16 %v1804, %v1800
        %v1869 = vpack.c.b16 %v1805, %v1801
        %v1870 = vpack.c.b16 %v1806, %v1802
        %1935 = vmatpush.bf16.msra.mxu0 %v1835
        %1936 = vmatpush.bf16.msra.mxu0 %v1831
        %1937 = vmatpush.bf16.msra.mxu0 %v1827
        %1938 = vmatpush.bf16.msra.mxu0 %v1823
        %1939 = vmatpush.bf16.msra.mxu0 %v1819
        %1940 = vmatpush.bf16.msra.mxu0 %v1815
        %1941 = vmatpush.bf16.msra.mxu0 %v1811
        %1942 = vmatpush.bf16.msra.mxu0 %v1807
        %1943 = vmatmul.bf16.gmra.mxu0 %v1549
        %v1944 = vpop.f32.mrf.mxu0
        %v1945 = vadd.f32 0.0, %v1944
        %v1946 = vpop.f32.mrf.mxu0
        %1947 = vdwg.mxu0
        %1948 = vmatpush.bf16.msra.mxu0 %v1867
        %1949 = vmatpush.bf16.msra.mxu0 %v1863
        %1950 = vmatpush.bf16.msra.mxu0 %v1859
        %1951 = vmatpush.bf16.msra.mxu0 %v1855
        %1952 = vmatpush.bf16.msra.mxu0 %v1851
        %1953 = vmatpush.bf16.msra.mxu0 %v1847
        %1954 = vmatpush.bf16.msra.mxu0 %v1843
        %1955 = vmatpush.bf16.msra.mxu0 %v1839
        %1956 = vmatmul.bf16.gmra.mxu0 %v1550
        %v1957 = vpop.f32.mrf.mxu0
        %v1958 = vadd.f32 %v1945, %v1957
        %v1959 = vpop.f32.mrf.mxu0
        %1960 = vdwg.mxu0
        %1961 = vmatpush.bf16.msra.mxu0 %v1836
        %1962 = vmatpush.bf16.msra.mxu0 %v1832
        %1963 = vmatpush.bf16.msra.mxu0 %v1828
        %1964 = vmatpush.bf16.msra.mxu0 %v1824
        %1965 = vmatpush.bf16.msra.mxu0 %v1820
        %1966 = vmatpush.bf16.msra.mxu0 %v1816
        %1967 = vmatpush.bf16.msra.mxu0 %v1812
        %1968 = vmatpush.bf16.msra.mxu0 %v1808
        %1969 = vmatmul.bf16.gmra.mxu0 %v1549
        %v1970 = vpop.f32.mrf.mxu0
        %v1971 = vadd.f32 0.0, %v1970
        %v1972 = vpop.f32.mrf.mxu0
        %1973 = vdwg.mxu0
        %1974 = vmatpush.bf16.msra.mxu0 %v1868
        %1975 = vmatpush.bf16.msra.mxu0 %v1864
        %1976 = vmatpush.bf16.msra.mxu0 %v1860
        %1977 = vmatpush.bf16.msra.mxu0 %v1856
        %1978 = vmatpush.bf16.msra.mxu0 %v1852
        %1979 = vmatpush.bf16.msra.mxu0 %v1848
        %1980 = vmatpush.bf16.msra.mxu0 %v1844
        %1981 = vmatpush.bf16.msra.mxu0 %v1840
        %1982 = vmatmul.bf16.gmra.mxu0 %v1550
        %v1983 = vpop.f32.mrf.mxu0
        %v1984 = vadd.f32 %v1971, %v1983
        %v1985 = vpop.f32.mrf.mxu0
        %1986 = vdwg.mxu0
        %1987 = vmatpush.bf16.msra.mxu0 %v1837
        %1988 = vmatpush.bf16.msra.mxu0 %v1833
        %1989 = vmatpush.bf16.msra.mxu0 %v1829
        %1990 = vmatpush.bf16.msra.mxu0 %v1825
        %1991 = vmatpush.bf16.msra.mxu0 %v1821
        %1992 = vmatpush.bf16.msra.mxu0 %v1817
        %1993 = vmatpush.bf16.msra.mxu0 %v1813
        %1994 = vmatpush.bf16.msra.mxu0 %v1809
        %1995 = vmatmul.bf16.gmra.mxu0 %v1549
        %v1996 = vpop.f32.mrf.mxu0
        %v1997 = vadd.f32 0.0, %v1996
        %v1998 = vpop.f32.mrf.mxu0
        %1999 = vdwg.mxu0
        %2000 = vmatpush.bf16.msra.mxu0 %v1869
        %2001 = vmatpush.bf16.msra.mxu0 %v1865
        %2002 = vmatpush.bf16.msra.mxu0 %v1861
        %2003 = vmatpush.bf16.msra.mxu0 %v1857
        %2004 = vmatpush.bf16.msra.mxu0 %v1853
        %2005 = vmatpush.bf16.msra.mxu0 %v1849
        %2006 = vmatpush.bf16.msra.mxu0 %v1845
        %2007 = vmatpush.bf16.msra.mxu0 %v1841
        %2008 = vmatmul.bf16.gmra.mxu0 %v1550
        %v2009 = vpop.f32.mrf.mxu0
        %v2010 = vadd.f32 %v1997, %v2009
        %v2011 = vpop.f32.mrf.mxu0
        %2012 = vdwg.mxu0
        %2013 = vmatpush.bf16.msra.mxu0 %v1838
        %2014 = vmatpush.bf16.msra.mxu0 %v1834
        %2015 = vmatpush.bf16.msra.mxu0 %v1830
        %2016 = vmatpush.bf16.msra.mxu0 %v1826
        %2017 = vmatpush.bf16.msra.mxu0 %v1822
        %2018 = vmatpush.bf16.msra.mxu0 %v1818
        %2019 = vmatpush.bf16.msra.mxu0 %v1814
        %2020 = vmatpush.bf16.msra.mxu0 %v1810
        %2021 = vmatmul.bf16.gmra.mxu0 %v1549
        %v2022 = vpop.f32.mrf.mxu0
        %v2023 = vadd.f32 0.0, %v2022
        %v2024 = vpop.f32.mrf.mxu0
        %2025 = vdwg.mxu0
        %2026 = vmatpush.bf16.msra.mxu0 %v1870
        %2027 = vmatpush.bf16.msra.mxu0 %v1866
        %2028 = vmatpush.bf16.msra.mxu0 %v1862
        %2029 = vmatpush.bf16.msra.mxu0 %v1858
        %2030 = vmatpush.bf16.msra.mxu0 %v1854
        %2031 = vmatpush.bf16.msra.mxu0 %v1850
        %2032 = vmatpush.bf16.msra.mxu0 %v1846
        %2033 = vmatpush.bf16.msra.mxu0 %v1842
        %2034 = vmatmul.bf16.gmra.mxu0 %v1550
        %v2035 = vpop.f32.mrf.mxu0
        %v2036 = vadd.f32 %v2023, %v2035
        %v2037 = vpop.f32.mrf.mxu0
        %2038 = vdwg.mxu0
        %v2039 = vxor.u32 %v1958, 2147483648
        %v2040 = vxor.u32 %v1984, 2147483648
        %v2041 = vmul.f32 %v2039, 1.442695
        %v2042 = vpow.pop %v2041
        %v2043 = vmul.f32 %v2040, 1.442695
        %v2044 = vpow.pop %v2043
        %v2045 = vadd.f32 %v2042, 1.0
        %v2046 = vadd.f32 %v2044, 1.0
        %v2047 = vrcp.pop %v2045
        %v2048 = vmul.f32 %v2045, %v2047
        %v2049 = vsub.f32 1.0, %v2048
        %v2050 = vmul.f32 %v2047, %v2049
        %v2051 = vadd.f32 %v2047, %v2050
        %vm2052 = vweird.f32 %v2045
        %vm2053 = vweird.f32 %v2047
        %vm2054 = vmor %vm2052, %vm2053
        %v2055 = vsel %vm2054, %v2047, %v2051
        %v2056 = vand.u32 2147483647, %v2045
        %vm2057 = vcmp.eq.f32.partialorder %v2056, 8.507059e+37
        %v2058 = vand.u32 %v2045, 2147483648
        %v2059 = vor.u32 1.1754944e-38, %v2058
        %v2060 = vsel %vm2057, %v2059, %v2055
        %v2061 = vmul.f32 1.0, %v2060
        %v2062 = vrcp.pop %v2046
        %v2063 = vmul.f32 %v2046, %v2062
        %v2064 = vsub.f32 1.0, %v2063
        %v2065 = vmul.f32 %v2062, %v2064
        %v2066 = vadd.f32 %v2062, %v2065
        %vm2067 = vweird.f32 %v2046
        %vm2068 = vweird.f32 %v2062
        %vm2069 = vmor %vm2067, %vm2068
        %v2070 = vsel %vm2069, %v2062, %v2066
        %v2071 = vand.u32 2147483647, %v2046
        %vm2072 = vcmp.eq.f32.partialorder %v2071, 8.507059e+37
        %v2073 = vand.u32 %v2046, 2147483648
        %v2074 = vor.u32 1.1754944e-38, %v2073
        %v2075 = vsel %vm2072, %v2074, %v2070
        %v2076 = vmul.f32 1.0, %v2075
        %v2077 = vmul.f32 %v1958, %v2061
        %v2078 = vmul.f32 %v1984, %v2076
        %v2079 = vmul.f32 %v2077, %v2010
        %v2080 = vmul.f32 %v2078, %v2036
        %v2081 = vpack.c.bf16 %v2079, %v2079
        %v2082 = vpack.c.bf16 %v2080, %v2080
        %v2083 = vld [vmem:[%s306 + $0x30] sm:$0xff]
        %v2084 = vld [vmem:[%s306 + $0x68] sm:$0xff]
        %v2085 = vld [vmem:[%s306 + $0xa0] sm:$0xff]
        %v2086 = vld [vmem:[%s306 + $0xd8] sm:$0xff]
        %v2087 = vld [vmem:[%s306 + $0x110] sm:$0xff]
        %v2088 = vld [vmem:[%s306 + $0x148] sm:$0xff]
        %v2089 = vld [vmem:[%s306 + $0x180] sm:$0xff]
        %v2090 = vld [vmem:[%s306 + $0x1b8] sm:$0xff]
        %v2091 = vld [vmem:[%s306 + $0x1f0] sm:$0xff]
        %v2092 = vld [vmem:[%s306 + $0x228] sm:$0xff]
        %v2093 = vld [vmem:[%s306 + $0x260] sm:$0xff]
        %v2094 = vld [vmem:[%s306 + $0x298] sm:$0xff]
        %v2095 = vld [vmem:[%s306 + $0x2d0] sm:$0xff]
        %v2096 = vld [vmem:[%s306 + $0x308] sm:$0xff]
        %v2097 = vld [vmem:[%s306 + $0x340] sm:$0xff]
        %v2098 = vld [vmem:[%s306 + $0x378] sm:$0xff]
        %v2099 = vld [vmem:[%s306 + $0x3b0] sm:$0xff]
        %v2100 = vld [vmem:[%s306 + $0x3e8] sm:$0xff]
        %v2101 = vld [vmem:[%s306 + $0x420] sm:$0xff]
        %v2102 = vld [vmem:[%s306 + $0x458] sm:$0xff]
        %v2103 = vld [vmem:[%s306 + $0x490] sm:$0xff]
        %v2104 = vld [vmem:[%s306 + $0x4c8] sm:$0xff]
        %v2105 = vld [vmem:[%s306 + $0x500] sm:$0xff]
        %v2106 = vld [vmem:[%s306 + $0x538] sm:$0xff]
        %v2107 = vld [vmem:[%s306 + $0x570] sm:$0xff]
        %v2108 = vld [vmem:[%s306 + $0x5a8] sm:$0xff]
        %v2109 = vld [vmem:[%s306 + $0x5e0] sm:$0xff]
        %v2110 = vld [vmem:[%s306 + $0x618] sm:$0xff]
        %v2111 = vld [vmem:[%s306 + $0x650] sm:$0xff]
        %v2112 = vld [vmem:[%s306 + $0x688] sm:$0xff]
        %v2113 = vld [vmem:[%s306 + $0x6c0] sm:$0xff]
        %v2114 = vld [vmem:[%s306 + $0x6f8] sm:$0xff]
        %v2147 = vunpack.c.l.b16 %v2083
        %v2148 = vunpack.c.h.b16 %v2083
        %v2149 = vunpack.c.l.b16 %v2084
        %v2150 = vunpack.c.h.b16 %v2084
        %v2151 = vunpack.c.l.b16 %v2085
        %v2152 = vunpack.c.h.b16 %v2085
        %v2153 = vunpack.c.l.b16 %v2086
        %v2154 = vunpack.c.h.b16 %v2086
        %v2155 = vunpack.c.l.b16 %v2087
        %v2156 = vunpack.c.h.b16 %v2087
        %v2157 = vunpack.c.l.b16 %v2088
        %v2158 = vunpack.c.h.b16 %v2088
        %v2159 = vunpack.c.l.b16 %v2089
        %v2160 = vunpack.c.h.b16 %v2089
        %v2161 = vunpack.c.l.b16 %v2090
        %v2162 = vunpack.c.h.b16 %v2090
        %v2163 = vunpack.c.l.b16 %v2091
        %v2164 = vunpack.c.h.b16 %v2091
        %v2165 = vunpack.c.l.b16 %v2092
        %v2166 = vunpack.c.h.b16 %v2092
        %v2167 = vunpack.c.l.b16 %v2093
        %v2168 = vunpack.c.h.b16 %v2093
        %v2169 = vunpack.c.l.b16 %v2094
        %v2170 = vunpack.c.h.b16 %v2094
        %v2171 = vunpack.c.l.b16 %v2095
        %v2172 = vunpack.c.h.b16 %v2095
        %v2173 = vunpack.c.l.b16 %v2096
        %v2174 = vunpack.c.h.b16 %v2096
        %v2175 = vunpack.c.l.b16 %v2097
        %v2176 = vunpack.c.h.b16 %v2097
        %v2177 = vunpack.c.l.b16 %v2098
        %v2178 = vunpack.c.h.b16 %v2098
        %v2179 = vunpack.c.l.b16 %v2099
        %v2180 = vunpack.c.h.b16 %v2099
        %v2181 = vunpack.c.l.b16 %v2100
        %v2182 = vunpack.c.h.b16 %v2100
        %v2183 = vunpack.c.l.b16 %v2101
        %v2184 = vunpack.c.h.b16 %v2101
        %v2185 = vunpack.c.l.b16 %v2102
        %v2186 = vunpack.c.h.b16 %v2102
        %v2187 = vunpack.c.l.b16 %v2103
        %v2188 = vunpack.c.h.b16 %v2103
        %v2189 = vunpack.c.l.b16 %v2104
        %v2190 = vunpack.c.h.b16 %v2104
        %v2191 = vunpack.c.l.b16 %v2105
        %v2192 = vunpack.c.h.b16 %v2105
        %v2193 = vunpack.c.l.b16 %v2106
        %v2194 = vunpack.c.h.b16 %v2106
        %v2195 = vunpack.c.l.b16 %v2107
        %v2196 = vunpack.c.h.b16 %v2107
        %v2197 = vunpack.c.l.b16 %v2108
        %v2198 = vunpack.c.h.b16 %v2108
        %v2199 = vunpack.c.l.b16 %v2109
        %v2200 = vunpack.c.h.b16 %v2109
        %v2201 = vunpack.c.l.b16 %v2110
        %v2202 = vunpack.c.h.b16 %v2110
        %v2203 = vunpack.c.l.b16 %v2111
        %v2204 = vunpack.c.h.b16 %v2111
        %v2205 = vunpack.c.l.b16 %v2112
        %v2206 = vunpack.c.h.b16 %v2112
        %v2207 = vunpack.c.l.b16 %v2113
        %v2208 = vunpack.c.h.b16 %v2113
        %v2209 = vunpack.c.l.b16 %v2114
        %v2210 = vunpack.c.h.b16 %v2114
        %v2211 = vpack.c.b16 %v2149, %v2147
        %v2212 = vpack.c.b16 %v2150, %v2148
        %v2213 = vpack.c.b16 %v2153, %v2151
        %v2214 = vpack.c.b16 %v2154, %v2152
        %v2215 = vpack.c.b16 %v2157, %v2155
        %v2216 = vpack.c.b16 %v2158, %v2156
        %v2217 = vpack.c.b16 %v2161, %v2159
        %v2218 = vpack.c.b16 %v2162, %v2160
        %v2219 = vpack.c.b16 %v2165, %v2163
        %v2220 = vpack.c.b16 %v2166, %v2164
        %v2221 = vpack.c.b16 %v2169, %v2167
        %v2222 = vpack.c.b16 %v2170, %v2168
        %v2223 = vpack.c.b16 %v2173, %v2171
        %v2224 = vpack.c.b16 %v2174, %v2172
        %v2225 = vpack.c.b16 %v2177, %v2175
        %v2226 = vpack.c.b16 %v2178, %v2176
        %v2227 = vpack.c.b16 %v2181, %v2179
        %v2228 = vpack.c.b16 %v2182, %v2180
        %v2229 = vpack.c.b16 %v2185, %v2183
        %v2230 = vpack.c.b16 %v2186, %v2184
        %v2231 = vpack.c.b16 %v2189, %v2187
        %v2232 = vpack.c.b16 %v2190, %v2188
        %v2233 = vpack.c.b16 %v2193, %v2191
        %v2234 = vpack.c.b16 %v2194, %v2192
        %v2235 = vpack.c.b16 %v2197, %v2195
        %v2236 = vpack.c.b16 %v2198, %v2196
        %v2237 = vpack.c.b16 %v2201, %v2199
        %v2238 = vpack.c.b16 %v2202, %v2200
        %v2239 = vpack.c.b16 %v2205, %v2203
        %v2240 = vpack.c.b16 %v2206, %v2204
        %v2241 = vpack.c.b16 %v2209, %v2207
        %v2242 = vpack.c.b16 %v2210, %v2208
        %2275 = vmatpush.bf16.msra.mxu0 %v2225
        %2276 = vmatpush.bf16.msra.mxu0 %v2223
        %2277 = vmatpush.bf16.msra.mxu0 %v2221
        %2278 = vmatpush.bf16.msra.mxu0 %v2219
        %2279 = vmatpush.bf16.msra.mxu0 %v2217
        %2280 = vmatpush.bf16.msra.mxu0 %v2215
        %2281 = vmatpush.bf16.msra.mxu0 %v2213
        %2282 = vmatpush.bf16.msra.mxu0 %v2211
        %2283 = vmatmul.bf16.gmra.mxu0 %v2081
        %v2284 = vpop.f32.mrf.mxu0
        %v2285 = vadd.f32 0.0, %v2284
        %v2286 = vpop.f32.mrf.mxu0
        %2287 = vdwg.mxu0
        %2288 = vmatpush.bf16.msra.mxu0 %v2241
        %2289 = vmatpush.bf16.msra.mxu0 %v2239
        %2290 = vmatpush.bf16.msra.mxu0 %v2237
        %2291 = vmatpush.bf16.msra.mxu0 %v2235
        %2292 = vmatpush.bf16.msra.mxu0 %v2233
        %2293 = vmatpush.bf16.msra.mxu0 %v2231
        %2294 = vmatpush.bf16.msra.mxu0 %v2229
        %2295 = vmatpush.bf16.msra.mxu0 %v2227
        %2296 = vmatmul.bf16.gmra.mxu0 %v2082
        %v2297 = vpop.f32.mrf.mxu0
        %v2298 = vadd.f32 %v2285, %v2297
        %v2299 = vpop.f32.mrf.mxu0
        %2300 = vdwg.mxu0
        %2301 = vmatpush.bf16.msra.mxu0 %v2226
        %2302 = vmatpush.bf16.msra.mxu0 %v2224
        %2303 = vmatpush.bf16.msra.mxu0 %v2222
        %2304 = vmatpush.bf16.msra.mxu0 %v2220
        %2305 = vmatpush.bf16.msra.mxu0 %v2218
        %2306 = vmatpush.bf16.msra.mxu0 %v2216
        %2307 = vmatpush.bf16.msra.mxu0 %v2214
        %2308 = vmatpush.bf16.msra.mxu0 %v2212
        %2309 = vmatmul.bf16.gmra.mxu0 %v2081
        %v2310 = vpop.f32.mrf.mxu0
        %v2311 = vadd.f32 0.0, %v2310
        %v2312 = vpop.f32.mrf.mxu0
        %2313 = vdwg.mxu0
        %2314 = vmatpush.bf16.msra.mxu0 %v2242
        %2315 = vmatpush.bf16.msra.mxu0 %v2240
        %2316 = vmatpush.bf16.msra.mxu0 %v2238
        %2317 = vmatpush.bf16.msra.mxu0 %v2236
        %2318 = vmatpush.bf16.msra.mxu0 %v2234
        %2319 = vmatpush.bf16.msra.mxu0 %v2232
        %2320 = vmatpush.bf16.msra.mxu0 %v2230
        %2321 = vmatpush.bf16.msra.mxu0 %v2228
        %2322 = vmatmul.bf16.gmra.mxu0 %v2082
        %v2323 = vpop.f32.mrf.mxu0
        %v2324 = vadd.f32 %v2311, %v2323
        %v2325 = vpop.f32.mrf.mxu0
        %2326 = vdwg.mxu0
        %2327 = vst [vmem:[#allocation2] sm:$0xff] %v2298
        %2328 = vst [vmem:[#allocation2 + $0x8] sm:$0xff] %v2324
        %p2329 = scmp.eq.s32.totalorder %s23, 1
        // Predicated region
        $region65: #{qwen_forward.1} parent=47 // pred_check
          %p2330 = pneg %p2329
        $region66: #{qwen_forward.1} parent=47 // pred_check_branch
          %2332 = sbr.rel (%p2330) target = $region68
        $region67: #{qwen_forward.1} parent=47 // pred_region
          %v2333 = vld [vmem:[#allocation3] sm:$0xff]
          %v2334 = vld [vmem:[#allocation3 + $0x8] sm:$0xff]
          %v2335 = vadd.f32 %v2298, %v2333
          %v2336 = vadd.f32 %v2324, %v2334
          %v2337 = vld [vmem:[#allocation4] sm:$0x3]
          %v2338 = vmul.f32 %v2335, %v2335
          %v2339 = vmul.f32 %v2336, %v2336
          %v2340 = vadd.f32 %v2338, %v2339
          %2341 = vadd.xlane.f32.xlu0 %v2340
          %v2342 = vpop.xlane.xlu0 %2341
          %v2343 = vmul.f32 %v2342, %v371
          %v2344 = vadd.f32 %v2343, 1e-06
          %v2345 = vrsqrt.pop %v2344
          %v2346 = vmul.f32 %v2345, %v2344
          %v2347 = vmul.f32 %v2346, %v2345
          %v2348 = vmul.f32 0.5, %v2347
          %v2349 = vsub.f32 1.5, %v2348
          %v2350 = vmul.f32 %v2345, %v2349
          %vm2351 = vweird.f32 %v2344
          %vm2352 = vweird.f32 %v2345
          %vm2353 = vmor %vm2351, %vm2352
          %v2354 = vsel %vm2353, %v2345, %v2350
          %v2355 = vmul.f32 %v2335, %v2354
          %v2356 = vmul.f32 %v2336, %v2354
          %v2358 = vperm.slane %v2337, 0
          %v2359 = vperm.slane %v2337, 1
          %v2362 = vmul.f32 %v2355, %v2358
          %v2363 = vmul.f32 %v2356, %v2359
          %2364 = vst [vmem:[#allocation10] sm:$0xff] %v2362
          %2365 = vst [vmem:[#allocation10 + $0x8] sm:$0xff] %v2363
        $region68: #{qwen_forward.1} parent=47 // pred_fallthru
          _
        // Predicated region
        $region69: #{qwen_forward.1} parent=47 // pred_check
          %p2366 = pneg %p193
        $region70: #{qwen_forward.1} parent=47 // pred_check_branch
          %2368 = sbr.rel (%p2366) target = $region72
        $region71: #{qwen_forward.1} parent=47 // pred_region
          %2370 = vsyncadd [#allocation6], 0
          %s2372 = sshll.u32 [#allocation10], 4
          %s2373 = int_to_ptr.vmem [resolvable:$true] %s2372
          %s2374 = sshll.u32 %s7, 4
          %s2375 = int_to_ptr.hbm [resolvable:$true] %s2374
          %2377 = dma.vmem_to_hbm [thread:$0]  %s2373, 256, %s2375, [#allocation6]
        $region72: #{qwen_forward.1} parent=47 // pred_fallthru
          _
        // Predicated region
        $region73: #{qwen_forward.1} parent=47 // pred_check
          %p2378 = pneg %p193
        $region74: #{qwen_forward.1} parent=47 // pred_check_branch
          %2380 = sbr.rel (%p2378) target = $region76
        $region75: #{qwen_forward.1} parent=47 // pred_region
          %2382 = dma.done [#allocation6], 256
        $region76: #{qwen_forward.1} parent=47 // pred_fallthru
          _
      $region48: #{qwen_forward.1} parent=5 // pred_fallthru
        _
      %p2383 = scmp.le.s32.totalorder 2, %s18
      // Predicated region
      $region77: #{qwen_forward.1} parent=5 // pred_check
        %p2384 = pneg %p2383
      $region78: #{qwen_forward.1} parent=5 // pred_check_branch
        %2386 = sbr.rel (%p2384) target = $region80
      $region79: #{qwen_forward.1} parent=5 // pred_region
        %s2387 = ssub.s32 %s18, 2
      $region80: #{qwen_forward.1} parent=5 // pred_fallthru
        _
    $region6: #{qwen_forward.1} parent=1 // loop_footer
      %s22 = sadd.s32 1, %s18
    $region7: #{qwen_forward.1} parent=1 // loop_footer_branch
      %17 = sbr.rel target = $region3
    $region8: #{qwen_forward.1} parent=1 // loop_exit
      _
    %2388 = vsyncpa [#allocation5], 1
    %s2389 = scalar_lea.sflag [#allocation5], 1
    %2390 = vsyncpa %s2389, 1
    %2391 = vsyncpa [#allocation8], 1
    %s2392 = scalar_lea.sflag [#allocation8], 1
    %2393 = vsyncpa %s2392, 1
    %2394 = vsyncpa [#allocation6], 1
    %s2395 = scalar_lea.sflag [#allocation6], 1
    %2396 = vsyncpa %s2395, 1

</llo_original>
